<compile_context>
chip_gen: v7x
topology: tpu7x:2x2x1
jax: 0.10.0
libtpu: 0.0.40
codegen_flags: <defaults>
</compile_context>

<pallas_src>
import functools

import jax
import jax.numpy as jnp
from jax.experimental import pallas as pl
from jax.experimental.pallas import tpu as pltpu


# ---------------------------------------------------------------------------
# In-kernel helpers (f32 elementwise math)
# ---------------------------------------------------------------------------
def _layernorm(x, gamma, beta, eps=1e-12):
    mu = jnp.mean(x, axis=-1, keepdims=True)
    var = jnp.mean((x - mu) ** 2, axis=-1, keepdims=True)
    return (x - mu) * jax.lax.rsqrt(var + eps) * gamma + beta


def _gelu_tanh(x):
    # tanh-approximate GELU ("gelu_new") — EUP-friendly on TPU.
    c = 0.7978845608028654  # sqrt(2/pi)
    return 0.5 * x * (1.0 + jnp.tanh(c * (x + 0.044715 * x * x * x)))


# ---------------------------------------------------------------------------
# Fused encoder kernel: grid = (batch_tiles, layers)
# ---------------------------------------------------------------------------
def fused_encoder_kernel(emb_ref, bias_ref, eg_ref, eb_ref,
                         wqkv_ref, bqkv_ref, wo_ref, bo_ref,
                         ln1g_ref, ln1b_ref, w1_ref, b1_ref,
                         w2_ref, b2_ref, ln2g_ref, ln2b_ref,
                         cls_ref, h_ref, ctx_ref,
                         *, batch_tile, seq_len, num_heads, head_dim):
    layer = pl.program_id(1)
    bf16, f32 = jnp.bfloat16, jnp.float32
    Bt, S, nh, hd = batch_tile, seq_len, num_heads, head_dim
    H = nh * hd

    # --- layer 0: fused embedding LayerNorm into the residual-stream scratch --
    @pl.when(layer == 0)
    def _():
        for b in range(Bt):
            h_ref[b * S:(b + 1) * S, :] = _layernorm(
                emb_ref[b], eg_ref[...], eb_ref[...])

    x = h_ref[...]                       # [Bt*S, H] f32 residual stream (VMEM)
    xb = x.astype(bf16)

    # --- fused QKV projection: ONE [Bt*S, H] x [H, 3H] MXU matmul -------------
    # (bias added on the lane-dense [Bt*S, 3H] layout; 1/sqrt(hd) is already
    #  folded into the Q columns of wqkv/bqkv by the wrapper)
    qkv = jnp.dot(xb, wqkv_ref[0], preferred_element_type=f32) + bqkv_ref[0]

    # --- attention: per-(batch, head) score tiles; 2-D matmuls, static slices -
    for b in range(Bt):
        rows = slice(b * S, (b + 1) * S)
        bias_b = bias_ref[b]             # [1, S] additive mask (f32)
        for n in range(nh):
            q = qkv[rows, n * hd:(n + 1) * hd]
            k = qkv[rows, H + n * hd:H + (n + 1) * hd]
            v = qkv[rows, 2 * H + n * hd:2 * H + (n + 1) * hd]
            s = jax.lax.dot_general(q.astype(bf16), k.astype(bf16),
                                    (((1,), (1,)), ((), ())),
                                    preferred_element_type=f32)   # [S, S]
            s = s + bias_b
            s = s - jnp.max(s, axis=-1, keepdims=True)
            p = jnp.exp(s)
            p = p * pl.reciprocal(jnp.sum(p, axis=-1, keepdims=True), approx=True)
            ctx_ref[rows, n * hd:(n + 1) * hd] = jnp.dot(
                p.astype(bf16), v.astype(bf16), preferred_element_type=f32)

    # --- fused output projection: ONE [Bt*S, H] x [H, H] matmul (K = H) -------
    attn = (jnp.dot(ctx_ref[...].astype(bf16), wo_ref[0],
                    preferred_element_type=f32) + bo_ref[0])
    h1 = _layernorm(x + attn, ln1g_ref[0], ln1b_ref[0])

    # --- feed-forward (bf16 matmuls, f32 accumulate, f32 GELU) ----------------
    ff = jnp.dot(h1.astype(bf16), w1_ref[0], preferred_element_type=f32) + b1_ref[0]
    ff = _gelu_tanh(ff)
    ff = jnp.dot(ff.astype(bf16), w2_ref[0], preferred_element_type=f32) + b2_ref[0]

    h2 = _layernorm(h1 + ff, ln2g_ref[0], ln2b_ref[0])
    h_ref[...] = h2                      # carry to next layer

    # --- final layer: emit only the CLS rows ----------------------------------
    # NOTE: the CLS output block index is constant along the layer ("arbitrary")
    # axis, so this intentionally relies on output-block residency: the block is
    # only written on the last layer iteration and flushed to HBM afterwards.
    @pl.when(layer == pl.num_programs(1) - 1)
    def _():
        for b in range(Bt):
            cls_ref[b] = h2[b * S:b * S + 1, :]


# ---------------------------------------------------------------------------
# Wrapper (pallas_call plumbing)
# ---------------------------------------------------------------------------
def text_encoder_forward(params, input_ids, attention_mask, num_heads,
                         batch_tile=None):
    B, S = input_ids.shape
    H = params["word_emb"].shape[1]
    L = params["wq"].shape[0]
    F = params["w1"].shape[2]
    hd = H // num_heads

    # Batch tile: fold up to 2 sequences into the matmul M dimension per grid
    # step (weights are then streamed only B/Bt times).  For B/Bt >= 2 the
    # parallel batch-tile axis also feeds both v7x TensorCores.
    if batch_tile is None:
        batch_tile = 2 if (B % 2 == 0 and B >= 2) else 1
    Bt = batch_tile
    assert B % Bt == 0, "batch must be divisible by the batch tile"
    M = Bt * S

    # Embedding gather + positional add in plain XLA (data-dependent gather).
    emb = (params["word_emb"][input_ids]
           + params["pos_emb"][jnp.arange(S)][None, :, :]).astype(jnp.float32)
    # Precompute additive attention bias once (not per layer inside the kernel).
    bias = ((1.0 - attention_mask.astype(jnp.float32)) * -1e9).reshape(B, 1, S)

    # Fused QKV slab [L, H, 3H] (bf16) with 1/sqrt(hd) folded into the Q part.
    scale = 1.0 / float(hd) ** 0.5
    wqkv = jnp.concatenate([params["wq"] * scale, params["wk"], params["wv"]],
                           axis=-1).astype(jnp.bfloat16)
    bqkv = jnp.concatenate([params["bq"] * scale, params["bk"], params["bv"]],
                           axis=-1).astype(jnp.float32)
    wo = params["wo"].astype(jnp.bfloat16)
    w1 = params["w1"].astype(jnp.bfloat16)
    w2 = params["w2"].astype(jnp.bfloat16)

    # --- VMEM budget: double-buffered per-layer weights + live activations ----
    w_bytes = 2 * ((4 * H * H + 2 * H * F) * 2          # bf16 matmul weights
                   + (3 * H + 6 * H + F) * 4)           # f32 biases / LN params
    a_bytes = (2 * M * H * 4                            # emb block (dbl-buffered)
               + 2 * M * H * 4                          # hidden + ctx scratch
               + M * 3 * H * 4 + M * 3 * H * 2          # qkv f32 + bf16 casts
               + 4 * M * H * 4                          # attn / h1 / h2 temps
               + 2 * M * F * 4                          # FFN intermediate
               + 2 * Bt * num_heads * S * S * 4)        # score / prob tiles
    try:
        vmem_cap = int(getattr(pltpu.get_tpu_info(), "vmem_capacity_bytes",
                               64 << 20))
    except Exception:  # pragma: no cover - conservative fallback
        vmem_cap = 64 << 20
    vmem_limit = int(min(0.85 * vmem_cap,
                         max(w_bytes + a_bytes + (4 << 20), 32 << 20)))

    def bcast_spec(shape):   # same full block every grid step
        n = len(shape)
        return pl.BlockSpec(shape, lambda bt, l, _n=n: (0,) * _n)

    def layer_spec(arr):     # indexed by layer along the leading dim only
        shp = tuple(arr.shape)
        n = len(shp)
        return pl.BlockSpec((1,) + shp[1:],
                            lambda bt, l, _n=n: (l,) + (0,) * (_n - 1))

    in_specs = [
        pl.BlockSpec((Bt, S, H), lambda bt, l: (bt, 0, 0)),   # embeddings
        pl.BlockSpec((Bt, 1, S), lambda bt, l: (bt, 0, 0)),   # additive mask bias
        bcast_spec((1, H)), bcast_spec((1, H)),               # embed LN gamma/beta
        layer_spec(wqkv), layer_spec(bqkv),
        layer_spec(wo), layer_spec(params["bo"]),
        layer_spec(params["ln1_g"]), layer_spec(params["ln1_b"]),
        layer_spec(w1), layer_spec(params["b1"]),
        layer_spec(w2), layer_spec(params["b2"]),
        layer_spec(params["ln2_g"]), layer_spec(params["ln2_b"]),
    ]

    out = pl.pallas_call(
        functools.partial(fused_encoder_kernel, batch_tile=Bt, seq_len=S,
                          num_heads=num_heads, head_dim=hd),
        out_shape=jax.ShapeDtypeStruct((B, 1, H), jnp.float32),
        grid_spec=pltpu.PrefetchScalarGridSpec(
            num_scalar_prefetch=0,
            grid=(B // Bt, L),                 # layer axis innermost
            in_specs=in_specs,
            out_specs=pl.BlockSpec((Bt, 1, H), lambda bt, l: (bt, 0, 0)),
            scratch_shapes=[pltpu.VMEM((M, H), jnp.float32),   # hidden carry
                            pltpu.VMEM((M, H), jnp.float32)],  # ctx assembly
        ),
        compiler_params=pltpu.CompilerParams(
            dimension_semantics=("parallel", "arbitrary"),
            vmem_limit_bytes=vmem_limit,
        ),
    )(emb, bias, params["emb_ln_g"], params["emb_ln_b"],
      wqkv, bqkv, wo, params["bo"],
      params["ln1_g"], params["ln1_b"], w1, params["b1"],
      w2, params["b2"], params["ln2_g"], params["ln2_b"])

    # outputs.last_hidden_state[:, 0, :]  -> CLS token embedding
    return out[:, 0, :]


# ---------------------------------------------------------------------------
# Parameter init (deterministic, synthetic, layer-stacked)
# ---------------------------------------------------------------------------
def init_params(key, vocab, max_pos, H, F, num_layers):
    def normal(k, shape):
        return (0.02 * jax.random.normal(k, shape)).astype(jnp.float32)

    keys = jax.random.split(key, 8)
    L = num_layers
    return {
        "word_emb": normal(keys[0], (vocab, H)),
        "pos_emb": normal(keys[1], (max_pos, H)),
        "emb_ln_g": jnp.ones((1, H), jnp.float32),
        "emb_ln_b": jnp.zeros((1, H), jnp.float32),
        "wq": normal(keys[2], (L, H, H)), "bq": jnp.zeros((L, 1, H), jnp.float32),
        "wk": normal(keys[3], (L, H, H)), "bk": jnp.zeros((L, 1, H), jnp.float32),
        "wv": normal(keys[4], (L, H, H)), "bv": jnp.zeros((L, 1, H), jnp.float32),
        "wo": normal(keys[5], (L, H, H)), "bo": jnp.zeros((L, 1, H), jnp.float32),
        "ln1_g": jnp.ones((L, 1, H), jnp.float32),
        "ln1_b": jnp.zeros((L, 1, H), jnp.float32),
        "w1": normal(keys[6], (L, H, F)), "b1": jnp.zeros((L, 1, F), jnp.float32),
        "w2": normal(keys[7], (L, F, H)), "b2": jnp.zeros((L, 1, H), jnp.float32),
        "ln2_g": jnp.ones((L, 1, H), jnp.float32),
        "ln2_b": jnp.zeros((L, 1, H), jnp.float32),
    }


if __name__ == "__main__":
    # Small but MXU/vreg-aligned config: S multiple of 8, H multiple of 128, hd=64.
    B, S, H, NUM_HEADS, FFN, LAYERS = 2, 8, 128, 2, 256, 2
    VOCAB, MAX_POS = 64, 16

    key = jax.random.PRNGKey(0)
    k_params, k_ids = jax.random.split(key)
    params = init_params(k_params, VOCAB, MAX_POS, H, FFN, LAYERS)

    input_ids = jax.random.randint(k_ids, (B, S), 0, VOCAB, dtype=jnp.int32)
    attention_mask = jnp.ones((B, S), jnp.int32).at[1, 6:].set(0)  # batch-1 padded

    cls_emb = text_encoder_forward(params, input_ids, attention_mask, NUM_HEADS)
    jax.block_until_ready(cls_emb)
    assert cls_emb.shape == (B, H)
    assert bool(jnp.all(jnp.isfinite(cls_emb)))
    print("KERNEL_OK")
</pallas_src>

<mosaic_0001>
module attributes {stable_mosaic.version = 11 : i64} {
  func.func @fused_encoder_kernel(%arg0: i32, %arg1: i32, %arg2: memref<2x8x128xf32, #tpu.memory_space<vmem>>, %arg3: memref<2x1x8xf32, #tpu.memory_space<vmem>>, %arg4: memref<1x128xf32, #tpu.memory_space<vmem>>, %arg5: memref<1x128xf32, #tpu.memory_space<vmem>>, %arg6: memref<1x128x384xbf16, #tpu.memory_space<vmem>>, %arg7: memref<1x1x384xf32, #tpu.memory_space<vmem>>, %arg8: memref<1x128x128xbf16, #tpu.memory_space<vmem>>, %arg9: memref<1x1x128xf32, #tpu.memory_space<vmem>>, %arg10: memref<1x1x128xf32, #tpu.memory_space<vmem>>, %arg11: memref<1x1x128xf32, #tpu.memory_space<vmem>>, %arg12: memref<1x128x256xbf16, #tpu.memory_space<vmem>>, %arg13: memref<1x1x256xf32, #tpu.memory_space<vmem>>, %arg14: memref<1x256x128xbf16, #tpu.memory_space<vmem>>, %arg15: memref<1x1x128xf32, #tpu.memory_space<vmem>>, %arg16: memref<1x1x128xf32, #tpu.memory_space<vmem>>, %arg17: memref<1x1x128xf32, #tpu.memory_space<vmem>>, %arg18: memref<2x1x128xf32, #tpu.memory_space<vmem>>, %arg19: memref<16x128xf32, #tpu.memory_space<vmem>>, %arg20: memref<16x128xf32, #tpu.memory_space<vmem>>) attributes {dimension_semantics = [#tpu.dimension_semantics<parallel>, #tpu.dimension_semantics<arbitrary>], iteration_bounds = array<i64: 1, 2>, scalar_prefetch = 0 : i64, scratch_operands = 2 : i64, tpu.core_type = #tpu.core_type<tc>, window_params = [{transform_indices = @transform_0, window_bounds = array<i64: 2, 8, 128>}, {transform_indices = @transform_1, window_bounds = array<i64: 2, 1, 8>}, {pipeline_mode = #tpu.pipeline_mode<synchronous>, transform_indices = @transform_2, window_bounds = array<i64: 1, 128>}, {pipeline_mode = #tpu.pipeline_mode<synchronous>, transform_indices = @transform_3, window_bounds = array<i64: 1, 128>}, {transform_indices = @transform_4, window_bounds = array<i64: 1, 128, 384>}, {transform_indices = @transform_5, window_bounds = array<i64: 1, 1, 384>}, {transform_indices = @transform_6, window_bounds = array<i64: 1, 128, 128>}, {transform_indices = @transform_7, window_bounds = array<i64: 1, 1, 128>}, {transform_indices = @transform_8, window_bounds = array<i64: 1, 1, 128>}, {transform_indices = @transform_9, window_bounds = array<i64: 1, 1, 128>}, {transform_indices = @transform_10, window_bounds = array<i64: 1, 128, 256>}, {transform_indices = @transform_11, window_bounds = array<i64: 1, 1, 256>}, {transform_indices = @transform_12, window_bounds = array<i64: 1, 256, 128>}, {transform_indices = @transform_13, window_bounds = array<i64: 1, 1, 128>}, {transform_indices = @transform_14, window_bounds = array<i64: 1, 1, 128>}, {transform_indices = @transform_15, window_bounds = array<i64: 1, 1, 128>}, {transform_indices = @transform_16, window_bounds = array<i64: 2, 1, 128>}]} {
    %c0_i32 = arith.constant 0 : i32
    %0 = arith.cmpi eq, %arg1, %c0_i32 : i32
    %1 = arith.extui %0 : i1 to i32
    %c0_i32_0 = arith.constant 0 : i32
    %2 = arith.cmpi ne, %1, %c0_i32_0 : i32
    scf.if %2 {
      %c0_87 = arith.constant 0 : index
      %c0_88 = arith.constant 0 : index
      %c0_89 = arith.constant 0 : index
      %200 = vector.load %arg2[%c0_87, %c0_88, %c0_89] : memref<2x8x128xf32, #tpu.memory_space<vmem>>, vector<1x8x128xf32>
      %201 = vector.shape_cast %200 : vector<1x8x128xf32> to vector<8x128xf32>
      %c0_90 = arith.constant 0 : index
      %c0_91 = arith.constant 0 : index
      %202 = vector.load %arg4[%c0_90, %c0_91] : memref<1x128xf32, #tpu.memory_space<vmem>>, vector<1x128xf32>
      %c0_92 = arith.constant 0 : index
      %c0_93 = arith.constant 0 : index
      %203 = vector.load %arg5[%c0_92, %c0_93] : memref<1x128xf32, #tpu.memory_space<vmem>>, vector<1x128xf32>
      %cst_94 = arith.constant dense<0.000000e+00> : vector<8xf32>
      %204 = vector.multi_reduction <add>, %201, %cst_94 [1] : vector<8x128xf32> to vector<8xf32>
      %205 = vector.shape_cast %204 : vector<8xf32> to vector<8x1xf32>
      %cst_95 = arith.constant 1.280000e+02 : f32
      %206 = vector.broadcast %cst_95 : f32 to vector<8x1xf32>
      %207 = arith.divf %205, %206 : vector<8x1xf32>
      %208 = vector.broadcast %207 : vector<8x1xf32> to vector<8x128xf32>
      %209 = arith.subf %201, %208 : vector<8x128xf32>
      %210 = arith.mulf %209, %209 : vector<8x128xf32>
      %cst_96 = arith.constant dense<0.000000e+00> : vector<8xf32>
      %211 = vector.multi_reduction <add>, %210, %cst_96 [1] : vector<8x128xf32> to vector<8xf32>
      %212 = vector.shape_cast %211 : vector<8xf32> to vector<8x1xf32>
      %cst_97 = arith.constant 1.280000e+02 : f32
      %213 = vector.broadcast %cst_97 : f32 to vector<8x1xf32>
      %214 = arith.divf %212, %213 : vector<8x1xf32>
      %215 = vector.broadcast %207 : vector<8x1xf32> to vector<8x128xf32>
      %216 = arith.subf %201, %215 : vector<8x128xf32>
      %cst_98 = arith.constant 9.99999996E-13 : f32
      %217 = vector.broadcast %cst_98 : f32 to vector<8x1xf32>
      %218 = arith.addf %214, %217 : vector<8x1xf32>
      %219 = math.rsqrt %218 : vector<8x1xf32>
      %220 = vector.broadcast %219 : vector<8x1xf32> to vector<8x128xf32>
      %221 = arith.mulf %216, %220 : vector<8x128xf32>
      %222 = vector.broadcast %202 : vector<1x128xf32> to vector<8x128xf32>
      %223 = arith.mulf %221, %222 : vector<8x128xf32>
      %224 = vector.broadcast %203 : vector<1x128xf32> to vector<8x128xf32>
      %225 = arith.addf %223, %224 : vector<8x128xf32>
      %c0_99 = arith.constant 0 : index
      %c0_100 = arith.constant 0 : index
      %226 = vector.load %arg19[%c0_99, %c0_100] : memref<16x128xf32, #tpu.memory_space<vmem>>, vector<8x128xf32>
      tpu.vector_store %arg19[%c0_99, %c0_100], %225 {strides = array<i32>} : memref<16x128xf32, #tpu.memory_space<vmem>>, vector<8x128xf32>,
      %c1_101 = arith.constant 1 : index
      %c0_102 = arith.constant 0 : index
      %c0_103 = arith.constant 0 : index
      %227 = vector.load %arg2[%c1_101, %c0_102, %c0_103] : memref<2x8x128xf32, #tpu.memory_space<vmem>>, vector<1x8x128xf32>
      %228 = vector.shape_cast %227 : vector<1x8x128xf32> to vector<8x128xf32>
      %c0_104 = arith.constant 0 : index
      %c0_105 = arith.constant 0 : index
      %229 = vector.load %arg4[%c0_104, %c0_105] : memref<1x128xf32, #tpu.memory_space<vmem>>, vector<1x128xf32>
      %c0_106 = arith.constant 0 : index
      %c0_107 = arith.constant 0 : index
      %230 = vector.load %arg5[%c0_106, %c0_107] : memref<1x128xf32, #tpu.memory_space<vmem>>, vector<1x128xf32>
      %cst_108 = arith.constant dense<0.000000e+00> : vector<8xf32>
      %231 = vector.multi_reduction <add>, %228, %cst_108 [1] : vector<8x128xf32> to vector<8xf32>
      %232 = vector.shape_cast %231 : vector<8xf32> to vector<8x1xf32>
      %cst_109 = arith.constant 1.280000e+02 : f32
      %233 = vector.broadcast %cst_109 : f32 to vector<8x1xf32>
      %234 = arith.divf %232, %233 : vector<8x1xf32>
      %235 = vector.broadcast %234 : vector<8x1xf32> to vector<8x128xf32>
      %236 = arith.subf %228, %235 : vector<8x128xf32>
      %237 = arith.mulf %236, %236 : vector<8x128xf32>
      %cst_110 = arith.constant dense<0.000000e+00> : vector<8xf32>
      %238 = vector.multi_reduction <add>, %237, %cst_110 [1] : vector<8x128xf32> to vector<8xf32>
      %239 = vector.shape_cast %238 : vector<8xf32> to vector<8x1xf32>
      %cst_111 = arith.constant 1.280000e+02 : f32
      %240 = vector.broadcast %cst_111 : f32 to vector<8x1xf32>
      %241 = arith.divf %239, %240 : vector<8x1xf32>
      %242 = vector.broadcast %234 : vector<8x1xf32> to vector<8x128xf32>
      %243 = arith.subf %228, %242 : vector<8x128xf32>
      %cst_112 = arith.constant 9.99999996E-13 : f32
      %244 = vector.broadcast %cst_112 : f32 to vector<8x1xf32>
      %245 = arith.addf %241, %244 : vector<8x1xf32>
      %246 = math.rsqrt %245 : vector<8x1xf32>
      %247 = vector.broadcast %246 : vector<8x1xf32> to vector<8x128xf32>
      %248 = arith.mulf %243, %247 : vector<8x128xf32>
      %249 = vector.broadcast %229 : vector<1x128xf32> to vector<8x128xf32>
      %250 = arith.mulf %248, %249 : vector<8x128xf32>
      %251 = vector.broadcast %230 : vector<1x128xf32> to vector<8x128xf32>
      %252 = arith.addf %250, %251 : vector<8x128xf32>
      %c8_113 = arith.constant 8 : index
      %c0_114 = arith.constant 0 : index
      %253 = vector.load %arg19[%c8_113, %c0_114] : memref<16x128xf32, #tpu.memory_space<vmem>>, vector<8x128xf32>
      tpu.vector_store %arg19[%c8_113, %c0_114], %252 {strides = array<i32>} : memref<16x128xf32, #tpu.memory_space<vmem>>, vector<8x128xf32>,
    } else {
    }
    %c0 = arith.constant 0 : index
    %c0_1 = arith.constant 0 : index
    %3 = vector.load %arg19[%c0, %c0_1] : memref<16x128xf32, #tpu.memory_space<vmem>>, vector<16x128xf32>
    %4 = arith.truncf %3 : vector<16x128xf32> to vector<16x128xbf16>
    %c0_2 = arith.constant 0 : index
    %c0_3 = arith.constant 0 : index
    %c0_4 = arith.constant 0 : index
    %5 = vector.load %arg6[%c0_2, %c0_3, %c0_4] : memref<1x128x384xbf16, #tpu.memory_space<vmem>>, vector<1x128x384xbf16>
    %6 = vector.shape_cast %5 : vector<1x128x384xbf16> to vector<128x384xbf16>
    %cst = arith.constant dense<0.000000e+00> : vector<16x384xf32>
    %7 = tpu.matmul %4, %6, %cst {dimension_numbers = #tpu.dot_dimension_numbers<[1], [0], [0], [1], [0, 0, 1, 1], [], []>} : vector<16x128xbf16>, vector<128x384xbf16>, vector<16x384xf32> -> vector<16x384xf32>
    %c0_5 = arith.constant 0 : index
    %c0_6 = arith.constant 0 : index
    %c0_7 = arith.constant 0 : index
    %8 = vector.load %arg7[%c0_5, %c0_6, %c0_7] : memref<1x1x384xf32, #tpu.memory_space<vmem>>, vector<1x1x384xf32>
    %9 = vector.shape_cast %8 : vector<1x1x384xf32> to vector<1x384xf32>
    %10 = vector.broadcast %9 : vector<1x384xf32> to vector<16x384xf32>
    %11 = arith.addf %7, %10 : vector<16x384xf32>
    %c0_8 = arith.constant 0 : index
    %c0_9 = arith.constant 0 : index
    %c0_10 = arith.constant 0 : index
    %12 = vector.load %arg3[%c0_8, %c0_9, %c0_10] : memref<2x1x8xf32, #tpu.memory_space<vmem>>, vector<1x1x8xf32>
    %13 = vector.shape_cast %12 : vector<1x1x8xf32> to vector<1x8xf32>
    %14 = vector.extract_strided_slice %11 {offsets = [0, 0], sizes = [8, 64], strides = [1, 1]} : vector<16x384xf32> to vector<8x64xf32>
    %15 = vector.extract_strided_slice %11 {offsets = [0, 128], sizes = [8, 64], strides = [1, 1]} : vector<16x384xf32> to vector<8x64xf32>
    %16 = vector.extract_strided_slice %11 {offsets = [0, 256], sizes = [8, 64], strides = [1, 1]} : vector<16x384xf32> to vector<8x64xf32>
    %17 = arith.truncf %14 : vector<8x64xf32> to vector<8x64xbf16>
    %18 = arith.truncf %15 : vector<8x64xf32> to vector<8x64xbf16>
    %cst_11 = arith.constant dense<0.000000e+00> : vector<8x8xf32>
    %19 = tpu.matmul %17, %18, %cst_11 {dimension_numbers = #tpu.dot_dimension_numbers<[1], [1], [0], [0], [0, 0, 1, 0], [], []>} : vector<8x64xbf16>, vector<8x64xbf16>, vector<8x8xf32> -> vector<8x8xf32>
    %20 = vector.broadcast %13 : vector<1x8xf32> to vector<8x8xf32>
    %21 = arith.addf %19, %20 : vector<8x8xf32>
    %cst_12 = arith.constant dense<0xFF800000> : vector<8xf32>
    %22 = vector.multi_reduction <maximumf>, %21, %cst_12 [1] : vector<8x8xf32> to vector<8xf32>
    %23 = vector.shape_cast %22 : vector<8xf32> to vector<8x1xf32>
    %24 = vector.broadcast %23 : vector<8x1xf32> to vector<8x8xf32>
    %25 = arith.subf %21, %24 : vector<8x8xf32>
    %26 = math.exp %25 : vector<8x8xf32>
    %cst_13 = arith.constant dense<0.000000e+00> : vector<8xf32>
    %27 = vector.multi_reduction <add>, %26, %cst_13 [1] : vector<8x8xf32> to vector<8xf32>
    %28 = vector.shape_cast %27 : vector<8xf32> to vector<8x1xf32>
    %29 = tpu.reciprocal %28 {approx = true} : vector<8x1xf32> -> vector<8x1xf32>
    %30 = vector.broadcast %29 : vector<8x1xf32> to vector<8x8xf32>
    %31 = arith.mulf %26, %30 : vector<8x8xf32>
    %32 = arith.truncf %31 : vector<8x8xf32> to vector<8x8xbf16>
    %33 = arith.truncf %16 : vector<8x64xf32> to vector<8x64xbf16>
    %cst_14 = arith.constant dense<0.000000e+00> : vector<8x64xf32>
    %34 = tpu.matmul %32, %33, %cst_14 {dimension_numbers = #tpu.dot_dimension_numbers<[1], [0], [0], [1], [0, 0, 1, 1], [], []>} : vector<8x8xbf16>, vector<8x64xbf16>, vector<8x64xf32> -> vector<8x64xf32>
    %c0_15 = arith.constant 0 : index
    %c0_16 = arith.constant 0 : index
    %35 = vector.load %arg20[%c0_15, %c0_16] : memref<16x128xf32, #tpu.memory_space<vmem>>, vector<8x64xf32>
    tpu.vector_store %arg20[%c0_15, %c0_16], %34 {strides = array<i32>} : memref<16x128xf32, #tpu.memory_space<vmem>>, vector<8x64xf32>,
    %36 = vector.extract_strided_slice %11 {offsets = [0, 64], sizes = [8, 64], strides = [1, 1]} : vector<16x384xf32> to vector<8x64xf32>
    %37 = vector.extract_strided_slice %11 {offsets = [0, 192], sizes = [8, 64], strides = [1, 1]} : vector<16x384xf32> to vector<8x64xf32>
    %38 = vector.extract_strided_slice %11 {offsets = [0, 320], sizes = [8, 64], strides = [1, 1]} : vector<16x384xf32> to vector<8x64xf32>
    %39 = arith.truncf %36 : vector<8x64xf32> to vector<8x64xbf16>
    %40 = arith.truncf %37 : vector<8x64xf32> to vector<8x64xbf16>
    %cst_17 = arith.constant dense<0.000000e+00> : vector<8x8xf32>
    %41 = tpu.matmul %39, %40, %cst_17 {dimension_numbers = #tpu.dot_dimension_numbers<[1], [1], [0], [0], [0, 0, 1, 0], [], []>} : vector<8x64xbf16>, vector<8x64xbf16>, vector<8x8xf32> -> vector<8x8xf32>
    %42 = vector.broadcast %13 : vector<1x8xf32> to vector<8x8xf32>
    %43 = arith.addf %41, %42 : vector<8x8xf32>
    %cst_18 = arith.constant dense<0xFF800000> : vector<8xf32>
    %44 = vector.multi_reduction <maximumf>, %43, %cst_18 [1] : vector<8x8xf32> to vector<8xf32>
    %45 = vector.shape_cast %44 : vector<8xf32> to vector<8x1xf32>
    %46 = vector.broadcast %45 : vector<8x1xf32> to vector<8x8xf32>
    %47 = arith.subf %43, %46 : vector<8x8xf32>
    %48 = math.exp %47 : vector<8x8xf32>
    %cst_19 = arith.constant dense<0.000000e+00> : vector<8xf32>
    %49 = vector.multi_reduction <add>, %48, %cst_19 [1] : vector<8x8xf32> to vector<8xf32>
    %50 = vector.shape_cast %49 : vector<8xf32> to vector<8x1xf32>
    %51 = tpu.reciprocal %50 {approx = true} : vector<8x1xf32> -> vector<8x1xf32>
    %52 = vector.broadcast %51 : vector<8x1xf32> to vector<8x8xf32>
    %53 = arith.mulf %48, %52 : vector<8x8xf32>
    %54 = arith.truncf %53 : vector<8x8xf32> to vector<8x8xbf16>
    %55 = arith.truncf %38 : vector<8x64xf32> to vector<8x64xbf16>
    %cst_20 = arith.constant dense<0.000000e+00> : vector<8x64xf32>
    %56 = tpu.matmul %54, %55, %cst_20 {dimension_numbers = #tpu.dot_dimension_numbers<[1], [0], [0], [1], [0, 0, 1, 1], [], []>} : vector<8x8xbf16>, vector<8x64xbf16>, vector<8x64xf32> -> vector<8x64xf32>
    %c0_21 = arith.constant 0 : index
    %c64 = arith.constant 64 : index
    %57 = vector.load %arg20[%c0_21, %c64] : memref<16x128xf32, #tpu.memory_space<vmem>>, vector<8x64xf32>
    tpu.vector_store %arg20[%c0_21, %c64], %56 {strides = array<i32>} : memref<16x128xf32, #tpu.memory_space<vmem>>, vector<8x64xf32>,
    %c1 = arith.constant 1 : index
    %c0_22 = arith.constant 0 : index
    %c0_23 = arith.constant 0 : index
    %58 = vector.load %arg3[%c1, %c0_22, %c0_23] : memref<2x1x8xf32, #tpu.memory_space<vmem>>, vector<1x1x8xf32>
    %59 = vector.shape_cast %58 : vector<1x1x8xf32> to vector<1x8xf32>
    %60 = vector.extract_strided_slice %11 {offsets = [8, 0], sizes = [8, 64], strides = [1, 1]} : vector<16x384xf32> to vector<8x64xf32>
    %61 = vector.extract_strided_slice %11 {offsets = [8, 128], sizes = [8, 64], strides = [1, 1]} : vector<16x384xf32> to vector<8x64xf32>
    %62 = vector.extract_strided_slice %11 {offsets = [8, 256], sizes = [8, 64], strides = [1, 1]} : vector<16x384xf32> to vector<8x64xf32>
    %63 = arith.truncf %60 : vector<8x64xf32> to vector<8x64xbf16>
    %64 = arith.truncf %61 : vector<8x64xf32> to vector<8x64xbf16>
    %cst_24 = arith.constant dense<0.000000e+00> : vector<8x8xf32>
    %65 = tpu.matmul %63, %64, %cst_24 {dimension_numbers = #tpu.dot_dimension_numbers<[1], [1], [0], [0], [0, 0, 1, 0], [], []>} : vector<8x64xbf16>, vector<8x64xbf16>, vector<8x8xf32> -> vector<8x8xf32>
    %66 = vector.broadcast %59 : vector<1x8xf32> to vector<8x8xf32>
    %67 = arith.addf %65, %66 : vector<8x8xf32>
    %cst_25 = arith.constant dense<0xFF800000> : vector<8xf32>
    %68 = vector.multi_reduction <maximumf>, %67, %cst_25 [1] : vector<8x8xf32> to vector<8xf32>
    %69 = vector.shape_cast %68 : vector<8xf32> to vector<8x1xf32>
    %70 = vector.broadcast %69 : vector<8x1xf32> to vector<8x8xf32>
    %71 = arith.subf %67, %70 : vector<8x8xf32>
    %72 = math.exp %71 : vector<8x8xf32>
    %cst_26 = arith.constant dense<0.000000e+00> : vector<8xf32>
    %73 = vector.multi_reduction <add>, %72, %cst_26 [1] : vector<8x8xf32> to vector<8xf32>
    %74 = vector.shape_cast %73 : vector<8xf32> to vector<8x1xf32>
    %75 = tpu.reciprocal %74 {approx = true} : vector<8x1xf32> -> vector<8x1xf32>
    %76 = vector.broadcast %75 : vector<8x1xf32> to vector<8x8xf32>
    %77 = arith.mulf %72, %76 : vector<8x8xf32>
    %78 = arith.truncf %77 : vector<8x8xf32> to vector<8x8xbf16>
    %79 = arith.truncf %62 : vector<8x64xf32> to vector<8x64xbf16>
    %cst_27 = arith.constant dense<0.000000e+00> : vector<8x64xf32>
    %80 = tpu.matmul %78, %79, %cst_27 {dimension_numbers = #tpu.dot_dimension_numbers<[1], [0], [0], [1], [0, 0, 1, 1], [], []>} : vector<8x8xbf16>, vector<8x64xbf16>, vector<8x64xf32> -> vector<8x64xf32>
    %c8 = arith.constant 8 : index
    %c0_28 = arith.constant 0 : index
    %81 = vector.load %arg20[%c8, %c0_28] : memref<16x128xf32, #tpu.memory_space<vmem>>, vector<8x64xf32>
    tpu.vector_store %arg20[%c8, %c0_28], %80 {strides = array<i32>} : memref<16x128xf32, #tpu.memory_space<vmem>>, vector<8x64xf32>,
    %82 = vector.extract_strided_slice %11 {offsets = [8, 64], sizes = [8, 64], strides = [1, 1]} : vector<16x384xf32> to vector<8x64xf32>
    %83 = vector.extract_strided_slice %11 {offsets = [8, 192], sizes = [8, 64], strides = [1, 1]} : vector<16x384xf32> to vector<8x64xf32>
    %84 = vector.extract_strided_slice %11 {offsets = [8, 320], sizes = [8, 64], strides = [1, 1]} : vector<16x384xf32> to vector<8x64xf32>
    %85 = arith.truncf %82 : vector<8x64xf32> to vector<8x64xbf16>
    %86 = arith.truncf %83 : vector<8x64xf32> to vector<8x64xbf16>
    %cst_29 = arith.constant dense<0.000000e+00> : vector<8x8xf32>
    %87 = tpu.matmul %85, %86, %cst_29 {dimension_numbers = #tpu.dot_dimension_numbers<[1], [1], [0], [0], [0, 0, 1, 0], [], []>} : vector<8x64xbf16>, vector<8x64xbf16>, vector<8x8xf32> -> vector<8x8xf32>
    %88 = vector.broadcast %59 : vector<1x8xf32> to vector<8x8xf32>
    %89 = arith.addf %87, %88 : vector<8x8xf32>
    %cst_30 = arith.constant dense<0xFF800000> : vector<8xf32>
    %90 = vector.multi_reduction <maximumf>, %89, %cst_30 [1] : vector<8x8xf32> to vector<8xf32>
    %91 = vector.shape_cast %90 : vector<8xf32> to vector<8x1xf32>
    %92 = vector.broadcast %91 : vector<8x1xf32> to vector<8x8xf32>
    %93 = arith.subf %89, %92 : vector<8x8xf32>
    %94 = math.exp %93 : vector<8x8xf32>
    %cst_31 = arith.constant dense<0.000000e+00> : vector<8xf32>
    %95 = vector.multi_reduction <add>, %94, %cst_31 [1] : vector<8x8xf32> to vector<8xf32>
    %96 = vector.shape_cast %95 : vector<8xf32> to vector<8x1xf32>
    %97 = tpu.reciprocal %96 {approx = true} : vector<8x1xf32> -> vector<8x1xf32>
    %98 = vector.broadcast %97 : vector<8x1xf32> to vector<8x8xf32>
    %99 = arith.mulf %94, %98 : vector<8x8xf32>
    %100 = arith.truncf %99 : vector<8x8xf32> to vector<8x8xbf16>
    %101 = arith.truncf %84 : vector<8x64xf32> to vector<8x64xbf16>
    %cst_32 = arith.constant dense<0.000000e+00> : vector<8x64xf32>
    %102 = tpu.matmul %100, %101, %cst_32 {dimension_numbers = #tpu.dot_dimension_numbers<[1], [0], [0], [1], [0, 0, 1, 1], [], []>} : vector<8x8xbf16>, vector<8x64xbf16>, vector<8x64xf32> -> vector<8x64xf32>
    %c8_33 = arith.constant 8 : index
    %c64_34 = arith.constant 64 : index
    %103 = vector.load %arg20[%c8_33, %c64_34] : memref<16x128xf32, #tpu.memory_space<vmem>>, vector<8x64xf32>
    tpu.vector_store %arg20[%c8_33, %c64_34], %102 {strides = array<i32>} : memref<16x128xf32, #tpu.memory_space<vmem>>, vector<8x64xf32>,
    %c0_35 = arith.constant 0 : index
    %c0_36 = arith.constant 0 : index
    %104 = vector.load %arg20[%c0_35, %c0_36] : memref<16x128xf32, #tpu.memory_space<vmem>>, vector<16x128xf32>
    %105 = arith.truncf %104 : vector<16x128xf32> to vector<16x128xbf16>
    %c0_37 = arith.constant 0 : index
    %c0_38 = arith.constant 0 : index
    %c0_39 = arith.constant 0 : index
    %106 = vector.load %arg8[%c0_37, %c0_38, %c0_39] : memref<1x128x128xbf16, #tpu.memory_space<vmem>>, vector<1x128x128xbf16>
    %107 = vector.shape_cast %106 : vector<1x128x128xbf16> to vector<128x128xbf16>
    %cst_40 = arith.constant dense<0.000000e+00> : vector<16x128xf32>
    %108 = tpu.matmul %105, %107, %cst_40 {dimension_numbers = #tpu.dot_dimension_numbers<[1], [0], [0], [1], [0, 0, 1, 1], [], []>} : vector<16x128xbf16>, vector<128x128xbf16>, vector<16x128xf32> -> vector<16x128xf32>
    %c0_41 = arith.constant 0 : index
    %c0_42 = arith.constant 0 : index
    %c0_43 = arith.constant 0 : index
    %109 = vector.load %arg9[%c0_41, %c0_42, %c0_43] : memref<1x1x128xf32, #tpu.memory_space<vmem>>, vector<1x1x128xf32>
    %110 = vector.shape_cast %109 : vector<1x1x128xf32> to vector<1x128xf32>
    %111 = vector.broadcast %110 : vector<1x128xf32> to vector<16x128xf32>
    %112 = arith.addf %108, %111 : vector<16x128xf32>
    %113 = arith.addf %3, %112 : vector<16x128xf32>
    %c0_44 = arith.constant 0 : index
    %c0_45 = arith.constant 0 : index
    %c0_46 = arith.constant 0 : index
    %114 = vector.load %arg10[%c0_44, %c0_45, %c0_46] : memref<1x1x128xf32, #tpu.memory_space<vmem>>, vector<1x1x128xf32>
    %115 = vector.shape_cast %114 : vector<1x1x128xf32> to vector<1x128xf32>
    %c0_47 = arith.constant 0 : index
    %c0_48 = arith.constant 0 : index
    %c0_49 = arith.constant 0 : index
    %116 = vector.load %arg11[%c0_47, %c0_48, %c0_49] : memref<1x1x128xf32, #tpu.memory_space<vmem>>, vector<1x1x128xf32>
    %117 = vector.shape_cast %116 : vector<1x1x128xf32> to vector<1x128xf32>
    %cst_50 = arith.constant dense<0.000000e+00> : vector<16xf32>
    %118 = vector.multi_reduction <add>, %113, %cst_50 [1] : vector<16x128xf32> to vector<16xf32>
    %119 = vector.shape_cast %118 : vector<16xf32> to vector<16x1xf32>
    %cst_51 = arith.constant 1.280000e+02 : f32
    %120 = vector.broadcast %cst_51 : f32 to vector<16x1xf32>
    %121 = arith.divf %119, %120 : vector<16x1xf32>
    %122 = vector.broadcast %121 : vector<16x1xf32> to vector<16x128xf32>
    %123 = arith.subf %113, %122 : vector<16x128xf32>
    %124 = arith.mulf %123, %123 : vector<16x128xf32>
    %cst_52 = arith.constant dense<0.000000e+00> : vector<16xf32>
    %125 = vector.multi_reduction <add>, %124, %cst_52 [1] : vector<16x128xf32> to vector<16xf32>
    %126 = vector.shape_cast %125 : vector<16xf32> to vector<16x1xf32>
    %cst_53 = arith.constant 1.280000e+02 : f32
    %127 = vector.broadcast %cst_53 : f32 to vector<16x1xf32>
    %128 = arith.divf %126, %127 : vector<16x1xf32>
    %129 = vector.broadcast %121 : vector<16x1xf32> to vector<16x128xf32>
    %130 = arith.subf %113, %129 : vector<16x128xf32>
    %cst_54 = arith.constant 9.99999996E-13 : f32
    %131 = vector.broadcast %cst_54 : f32 to vector<16x1xf32>
    %132 = arith.addf %128, %131 : vector<16x1xf32>
    %133 = math.rsqrt %132 : vector<16x1xf32>
    %134 = vector.broadcast %133 : vector<16x1xf32> to vector<16x128xf32>
    %135 = arith.mulf %130, %134 : vector<16x128xf32>
    %136 = vector.broadcast %115 : vector<1x128xf32> to vector<16x128xf32>
    %137 = arith.mulf %135, %136 : vector<16x128xf32>
    %138 = vector.broadcast %117 : vector<1x128xf32> to vector<16x128xf32>
    %139 = arith.addf %137, %138 : vector<16x128xf32>
    %140 = arith.truncf %139 : vector<16x128xf32> to vector<16x128xbf16>
    %c0_55 = arith.constant 0 : index
    %c0_56 = arith.constant 0 : index
    %c0_57 = arith.constant 0 : index
    %141 = vector.load %arg12[%c0_55, %c0_56, %c0_57] : memref<1x128x256xbf16, #tpu.memory_space<vmem>>, vector<1x128x256xbf16>
    %142 = vector.shape_cast %141 : vector<1x128x256xbf16> to vector<128x256xbf16>
    %cst_58 = arith.constant dense<0.000000e+00> : vector<16x256xf32>
    %143 = tpu.matmul %140, %142, %cst_58 {dimension_numbers = #tpu.dot_dimension_numbers<[1], [0], [0], [1], [0, 0, 1, 1], [], []>} : vector<16x128xbf16>, vector<128x256xbf16>, vector<16x256xf32> -> vector<16x256xf32>
    %c0_59 = arith.constant 0 : index
    %c0_60 = arith.constant 0 : index
    %c0_61 = arith.constant 0 : index
    %144 = vector.load %arg13[%c0_59, %c0_60, %c0_61] : memref<1x1x256xf32, #tpu.memory_space<vmem>>, vector<1x1x256xf32>
    %145 = vector.shape_cast %144 : vector<1x1x256xf32> to vector<1x256xf32>
    %146 = vector.broadcast %145 : vector<1x256xf32> to vector<16x256xf32>
    %147 = arith.addf %143, %146 : vector<16x256xf32>
    %cst_62 = arith.constant 5.000000e-01 : f32
    %148 = vector.broadcast %cst_62 : f32 to vector<16x256xf32>
    %149 = arith.mulf %148, %147 : vector<16x256xf32>
    %cst_63 = arith.constant 4.471500e-02 : f32
    %150 = vector.broadcast %cst_63 : f32 to vector<16x256xf32>
    %151 = arith.mulf %150, %147 : vector<16x256xf32>
    %152 = arith.mulf %151, %147 : vector<16x256xf32>
    %153 = arith.mulf %152, %147 : vector<16x256xf32>
    %154 = arith.addf %147, %153 : vector<16x256xf32>
    %cst_64 = arith.constant 0.797884583 : f32
    %155 = vector.broadcast %cst_64 : f32 to vector<16x256xf32>
    %156 = arith.mulf %155, %154 : vector<16x256xf32>
    %157 = math.tanh %156 : vector<16x256xf32>
    %cst_65 = arith.constant 1.000000e+00 : f32
    %158 = vector.broadcast %cst_65 : f32 to vector<16x256xf32>
    %159 = arith.addf %158, %157 : vector<16x256xf32>
    %160 = arith.mulf %149, %159 : vector<16x256xf32>
    %161 = arith.truncf %160 : vector<16x256xf32> to vector<16x256xbf16>
    %c0_66 = arith.constant 0 : index
    %c0_67 = arith.constant 0 : index
    %c0_68 = arith.constant 0 : index
    %162 = vector.load %arg14[%c0_66, %c0_67, %c0_68] : memref<1x256x128xbf16, #tpu.memory_space<vmem>>, vector<1x256x128xbf16>
    %163 = vector.shape_cast %162 : vector<1x256x128xbf16> to vector<256x128xbf16>
    %cst_69 = arith.constant dense<0.000000e+00> : vector<16x128xf32>
    %164 = tpu.matmul %161, %163, %cst_69 {dimension_numbers = #tpu.dot_dimension_numbers<[1], [0], [0], [1], [0, 0, 1, 1], [], []>} : vector<16x256xbf16>, vector<256x128xbf16>, vector<16x128xf32> -> vector<16x128xf32>
    %c0_70 = arith.constant 0 : index
    %c0_71 = arith.constant 0 : index
    %c0_72 = arith.constant 0 : index
    %165 = vector.load %arg15[%c0_70, %c0_71, %c0_72] : memref<1x1x128xf32, #tpu.memory_space<vmem>>, vector<1x1x128xf32>
    %166 = vector.shape_cast %165 : vector<1x1x128xf32> to vector<1x128xf32>
    %167 = vector.broadcast %166 : vector<1x128xf32> to vector<16x128xf32>
    %168 = arith.addf %164, %167 : vector<16x128xf32>
    %169 = arith.addf %139, %168 : vector<16x128xf32>
    %c0_73 = arith.constant 0 : index
    %c0_74 = arith.constant 0 : index
    %c0_75 = arith.constant 0 : index
    %170 = vector.load %arg16[%c0_73, %c0_74, %c0_75] : memref<1x1x128xf32, #tpu.memory_space<vmem>>, vector<1x1x128xf32>
    %171 = vector.shape_cast %170 : vector<1x1x128xf32> to vector<1x128xf32>
    %c0_76 = arith.constant 0 : index
    %c0_77 = arith.constant 0 : index
    %c0_78 = arith.constant 0 : index
    %172 = vector.load %arg17[%c0_76, %c0_77, %c0_78] : memref<1x1x128xf32, #tpu.memory_space<vmem>>, vector<1x1x128xf32>
    %173 = vector.shape_cast %172 : vector<1x1x128xf32> to vector<1x128xf32>
    %cst_79 = arith.constant dense<0.000000e+00> : vector<16xf32>
    %174 = vector.multi_reduction <add>, %169, %cst_79 [1] : vector<16x128xf32> to vector<16xf32>
    %175 = vector.shape_cast %174 : vector<16xf32> to vector<16x1xf32>
    %cst_80 = arith.constant 1.280000e+02 : f32
    %176 = vector.broadcast %cst_80 : f32 to vector<16x1xf32>
    %177 = arith.divf %175, %176 : vector<16x1xf32>
    %178 = vector.broadcast %177 : vector<16x1xf32> to vector<16x128xf32>
    %179 = arith.subf %169, %178 : vector<16x128xf32>
    %180 = arith.mulf %179, %179 : vector<16x128xf32>
    %cst_81 = arith.constant dense<0.000000e+00> : vector<16xf32>
    %181 = vector.multi_reduction <add>, %180, %cst_81 [1] : vector<16x128xf32> to vector<16xf32>
    %182 = vector.shape_cast %181 : vector<16xf32> to vector<16x1xf32>
    %cst_82 = arith.constant 1.280000e+02 : f32
    %183 = vector.broadcast %cst_82 : f32 to vector<16x1xf32>
    %184 = arith.divf %182, %183 : vector<16x1xf32>
    %185 = vector.broadcast %177 : vector<16x1xf32> to vector<16x128xf32>
    %186 = arith.subf %169, %185 : vector<16x128xf32>
    %cst_83 = arith.constant 9.99999996E-13 : f32
    %187 = vector.broadcast %cst_83 : f32 to vector<16x1xf32>
    %188 = arith.addf %184, %187 : vector<16x1xf32>
    %189 = math.rsqrt %188 : vector<16x1xf32>
    %190 = vector.broadcast %189 : vector<16x1xf32> to vector<16x128xf32>
    %191 = arith.mulf %186, %190 : vector<16x128xf32>
    %192 = vector.broadcast %171 : vector<1x128xf32> to vector<16x128xf32>
    %193 = arith.mulf %191, %192 : vector<16x128xf32>
    %194 = vector.broadcast %173 : vector<1x128xf32> to vector<16x128xf32>
    %195 = arith.addf %193, %194 : vector<16x128xf32>
    %c0_84 = arith.constant 0 : index
    %c0_85 = arith.constant 0 : index
    %196 = vector.load %arg19[%c0_84, %c0_85] : memref<16x128xf32, #tpu.memory_space<vmem>>, vector<16x128xf32>
    tpu.vector_store %arg19[%c0_84, %c0_85], %195 {strides = array<i32>} : memref<16x128xf32, #tpu.memory_space<vmem>>, vector<16x128xf32>,
    %c1_i32 = arith.constant 1 : i32
    %197 = arith.cmpi eq, %arg1, %c1_i32 : i32
    %198 = arith.extui %197 : i1 to i32
    %c0_i32_86 = arith.constant 0 : i32
    %199 = arith.cmpi ne, %198, %c0_i32_86 : i32
    scf.if %199 {
      %200 = vector.extract_strided_slice %195 {offsets = [0, 0], sizes = [1, 128], strides = [1, 1]} : vector<16x128xf32> to vector<1x128xf32>
      %c0_87 = arith.constant 0 : index
      %c0_88 = arith.constant 0 : index
      %c0_89 = arith.constant 0 : index
      %201 = vector.load %arg18[%c0_87, %c0_88, %c0_89] : memref<2x1x128xf32, #tpu.memory_space<vmem>>, vector<1x1x128xf32>
      %202 = vector.shape_cast %201 : vector<1x1x128xf32> to vector<1x128xf32>
      %203 = vector.shape_cast %200 : vector<1x128xf32> to vector<1x1x128xf32>
      tpu.vector_store %arg18[%c0_87, %c0_88, %c0_89], %203 {strides = array<i32>} : memref<2x1x128xf32, #tpu.memory_space<vmem>>, vector<1x1x128xf32>,
      %204 = vector.extract_strided_slice %195 {offsets = [8, 0], sizes = [1, 128], strides = [1, 1]} : vector<16x128xf32> to vector<1x128xf32>
      %c1_90 = arith.constant 1 : index
      %c0_91 = arith.constant 0 : index
      %c0_92 = arith.constant 0 : index
      %205 = vector.load %arg18[%c1_90, %c0_91, %c0_92] : memref<2x1x128xf32, #tpu.memory_space<vmem>>, vector<1x1x128xf32>
      %206 = vector.shape_cast %205 : vector<1x1x128xf32> to vector<1x128xf32>
      %207 = vector.shape_cast %204 : vector<1x128xf32> to vector<1x1x128xf32>
      tpu.vector_store %arg18[%c1_90, %c0_91, %c0_92], %207 {strides = array<i32>} : memref<2x1x128xf32, #tpu.memory_space<vmem>>, vector<1x1x128xf32>,
    } else {
    }
    return
  }
  func.func @transform_0(%arg0: i32, %arg1: i32) -> (i32, i32, i32) {
    %c0_i32 = arith.constant 0 : i32
    %c0_i32_0 = arith.constant 0 : i32
    %c0_i32_1 = arith.constant 0 : i32
    return %arg0, %c0_i32, %c0_i32_0 : i32, i32, i32
  }
  func.func @transform_1(%arg0: i32, %arg1: i32) -> (i32, i32, i32) {
    %c0_i32 = arith.constant 0 : i32
    %c0_i32_0 = arith.constant 0 : i32
    %c0_i32_1 = arith.constant 0 : i32
    return %arg0, %c0_i32, %c0_i32_0 : i32, i32, i32
  }
  func.func @transform_2(%arg0: i32, %arg1: i32) -> (i32, i32) {
    %c0_i32 = arith.constant 0 : i32
    %c0_i32_0 = arith.constant 0 : i32
    %c0_i32_1 = arith.constant 0 : i32
    return %c0_i32, %c0_i32_0 : i32, i32
  }
  func.func @transform_3(%arg0: i32, %arg1: i32) -> (i32, i32) {
    %c0_i32 = arith.constant 0 : i32
    %c0_i32_0 = arith.constant 0 : i32
    %c0_i32_1 = arith.constant 0 : i32
    return %c0_i32, %c0_i32_0 : i32, i32
  }
  func.func @transform_4(%arg0: i32, %arg1: i32) -> (i32, i32, i32) {
    %c0_i32 = arith.constant 0 : i32
    %c0_i32_0 = arith.constant 0 : i32
    %c0_i32_1 = arith.constant 0 : i32
    return %arg1, %c0_i32, %c0_i32_0 : i32, i32, i32
  }
  func.func @transform_5(%arg0: i32, %arg1: i32) -> (i32, i32, i32) {
    %c0_i32 = arith.constant 0 : i32
    %c0_i32_0 = arith.constant 0 : i32
    %c0_i32_1 = arith.constant 0 : i32
    return %arg1, %c0_i32, %c0_i32_0 : i32, i32, i32
  }
  func.func @transform_6(%arg0: i32, %arg1: i32) -> (i32, i32, i32) {
    %c0_i32 = arith.constant 0 : i32
    %c0_i32_0 = arith.constant 0 : i32
    %c0_i32_1 = arith.constant 0 : i32
    return %arg1, %c0_i32, %c0_i32_0 : i32, i32, i32
  }
  func.func @transform_7(%arg0: i32, %arg1: i32) -> (i32, i32, i32) {
    %c0_i32 = arith.constant 0 : i32
    %c0_i32_0 = arith.constant 0 : i32
    %c0_i32_1 = arith.constant 0 : i32
    return %arg1, %c0_i32, %c0_i32_0 : i32, i32, i32
  }
  func.func @transform_8(%arg0: i32, %arg1: i32) -> (i32, i32, i32) {
    %c0_i32 = arith.constant 0 : i32
    %c0_i32_0 = arith.constant 0 : i32
    %c0_i32_1 = arith.constant 0 : i32
    return %arg1, %c0_i32, %c0_i32_0 : i32, i32, i32
  }
  func.func @transform_9(%arg0: i32, %arg1: i32) -> (i32, i32, i32) {
    %c0_i32 = arith.constant 0 : i32
    %c0_i32_0 = arith.constant 0 : i32
    %c0_i32_1 = arith.constant 0 : i32
    return %arg1, %c0_i32, %c0_i32_0 : i32, i32, i32
  }
  func.func @transform_10(%arg0: i32, %arg1: i32) -> (i32, i32, i32) {
    %c0_i32 = arith.constant 0 : i32
    %c0_i32_0 = arith.constant 0 : i32
    %c0_i32_1 = arith.constant 0 : i32
    return %arg1, %c0_i32, %c0_i32_0 : i32, i32, i32
  }
  func.func @transform_11(%arg0: i32, %arg1: i32) -> (i32, i32, i32) {
    %c0_i32 = arith.constant 0 : i32
    %c0_i32_0 = arith.constant 0 : i32
    %c0_i32_1 = arith.constant 0 : i32
    return %arg1, %c0_i32, %c0_i32_0 : i32, i32, i32
  }
  func.func @transform_12(%arg0: i32, %arg1: i32) -> (i32, i32, i32) {
    %c0_i32 = arith.constant 0 : i32
    %c0_i32_0 = arith.constant 0 : i32
    %c0_i32_1 = arith.constant 0 : i32
    return %arg1, %c0_i32, %c0_i32_0 : i32, i32, i32
  }
  func.func @transform_13(%arg0: i32, %arg1: i32) -> (i32, i32, i32) {
    %c0_i32 = arith.constant 0 : i32
    %c0_i32_0 = arith.constant 0 : i32
    %c0_i32_1 = arith.constant 0 : i32
    return %arg1, %c0_i32, %c0_i32_0 : i32, i32, i32
  }
  func.func @transform_14(%arg0: i32, %arg1: i32) -> (i32, i32, i32) {
    %c0_i32 = arith.constant 0 : i32
    %c0_i32_0 = arith.constant 0 : i32
    %c0_i32_1 = arith.constant 0 : i32
    return %arg1, %c0_i32, %c0_i32_0 : i32, i32, i32
  }
  func.func @transform_15(%arg0: i32, %arg1: i32) -> (i32, i32, i32) {
    %c0_i32 = arith.constant 0 : i32
    %c0_i32_0 = arith.constant 0 : i32
    %c0_i32_1 = arith.constant 0 : i32
    return %arg1, %c0_i32, %c0_i32_0 : i32, i32, i32
  }
  func.func @transform_16(%arg0: i32, %arg1: i32) -> (i32, i32, i32) {
    %c0_i32 = arith.constant 0 : i32
    %c0_i32_0 = arith.constant 0 : i32
    %c0_i32_1 = arith.constant 0 : i32
    return %arg0, %c0_i32, %c0_i32_0 : i32, i32, i32
  }
}

</mosaic_0001>

<llo_original>
// kernel: tpu_custom_call.1
$region0: #{tpu_custom_call.1}
  #allocation0 [shape = 'u32[]', space=smem, size = 0x4, offset = 0x4, fixed_abs, tag = 'smem constant byte address 0x4 - core index']
  #allocation1 [shape = 'u32[144,128]{1,0:T(1,128)}', space=vmem, size = 0x12000, scoped, tag = 'internal scratch']
  #allocation2 [shape = 'f32[16,128]{1,0:T(8,128)}', space=vmem, size = 0x2000, scoped, tag = 'scratch operand']
  #allocation3 [shape = 'f32[16,128]{1,0:T(8,128)}', space=vmem, size = 0x2000, scoped, tag = 'scratch operand']
  %s0 = inlined_call_operand.hbm [shape: f32[2,8,128], index: 0, kind: input, shape index: {}]
  %s1 = inlined_call_operand.hbm [shape: f32[2,1,8], index: 1, kind: input, shape index: {}]
  %s2 = inlined_call_operand.hbm [shape: f32[1,128], index: 2, kind: input, shape index: {}]
  %s3 = inlined_call_operand.hbm [shape: f32[1,128], index: 3, kind: input, shape index: {}]
  %s4 = inlined_call_operand.hbm [shape: bf16[2,128,384], index: 4, kind: input, shape index: {}]
  %s5 = inlined_call_operand.vmem [shape: f32[2,1,384], index: 5, kind: input, shape index: {}]
  %s6 = inlined_call_operand.hbm [shape: bf16[2,128,128], index: 6, kind: input, shape index: {}]
  %s7 = inlined_call_operand.vmem [shape: f32[2,1,128], index: 7, kind: input, shape index: {}]
  %s8 = inlined_call_operand.vmem [shape: f32[2,1,128], index: 8, kind: input, shape index: {}]
  %s9 = inlined_call_operand.vmem [shape: f32[2,1,128], index: 9, kind: input, shape index: {}]
  %s10 = inlined_call_operand.hbm [shape: bf16[2,128,256], index: 10, kind: input, shape index: {}]
  %s11 = inlined_call_operand.vmem [shape: f32[2,1,256], index: 11, kind: input, shape index: {}]
  %s12 = inlined_call_operand.hbm [shape: bf16[2,256,128], index: 12, kind: input, shape index: {}]
  %s13 = inlined_call_operand.vmem [shape: f32[2,1,128], index: 13, kind: input, shape index: {}]
  %s14 = inlined_call_operand.vmem [shape: f32[2,1,128], index: 14, kind: input, shape index: {}]
  %s15 = inlined_call_operand.vmem [shape: f32[2,1,128], index: 15, kind: input, shape index: {}]
  %s16 = inlined_call_operand.hbm [shape: f32[2,1,128], index: 16, kind: output, shape index: {}]
  %s17 = sld [smem:[#allocation0]]
  $region137: #{tpu_custom_call.1} parent=0
    _
  %s19 = ssub.s32 1, %s17
  %s20 = scalar_select 0, %s19, %s17
  $region1: #{tpu_custom_call.1} parent=0
    #allocation4 [shape = 'u8[8192]{0}', space=vmem, size = 0x2000, scoped, tag = 'input window, operand 0, single buffered']
    #allocation5 [shape = 's32[2]{0}', space=sflag, size = 0x8, scoped, tag = 'scoped memory for tpu_custom_call.1']
    #allocation6 [shape = 's32[2]{0}', space=sflag, size = 0x8, scoped, tag = 'scoped memory for tpu_custom_call.1']
    #allocation7 [shape = 'u8[1024]{0}', space=vmem, size = 0x400, scoped, tag = 'input window, operand 1, single buffered']
    #allocation8 [shape = 's32[1]{0}', space=sflag, size = 0x4, scoped, tag = 'scoped memory for tpu_custom_call.1']
    #allocation9 [shape = 'u8[512]{0}', space=vmem, size = 0x400, scoped, tag = 'input window, operand 2, single buffered']
    #allocation10 [shape = 'u8[512]{0}', space=vmem, size = 0x400, scoped, tag = 'input window, operand 3, single buffered']
    #allocation11 [shape = 's32[1]{0}', space=sflag, size = 0x4, scoped, tag = 'scoped memory for tpu_custom_call.1']
    #allocation12 [shape = 'u8[196608]{0}', space=vmem, size = 0x30000, scoped, tag = 'input window, operand 4']
    #allocation13 [shape = 'u8[65536]{0}', space=vmem, size = 0x10000, scoped, tag = 'input window, operand 6']
    #allocation14 [shape = 'u8[131072]{0}', space=vmem, size = 0x20000, scoped, tag = 'input window, operand 10']
    #allocation15 [shape = 'u8[131072]{0}', space=vmem, size = 0x20000, scoped, tag = 'input window, operand 12']
    #allocation16 [shape = 'u8[1024]{0}', space=vmem, size = 0x400, scoped, tag = 'output window, operand 0, single buffered']
    %21 = vsyncpa [#allocation5], 0
    %22 = vsyncpa [#allocation8], 0
    %23 = vsyncpa [#allocation11], 0
    %24 = vsyncpa [#allocation6], 0
    loop: start=0, step=1, limit=4
    $region2: #{tpu_custom_call.1} parent=1 // loop_pre_header
      _
    $region3: #{tpu_custom_call.1} parent=1 // loop_header
      %s26 = sphi 0, %s30
      %p27 = scmp.ge.s32.totalorder %s26, 4
      %s33 = sphi 0, %s45
      %s34 = sphi 0, %s41
      %s35 = sphi 0, %s33
      %s36 = sphi 0, %s34
      %s37 = sphi 0, %s35
      %s38 = sphi 0, %s36
      %s48 = sphi 0, %s50
      %s51 = sphi 0, %s48
      %s52 = sphi 0, %s51
      %s68 = sphi 0, %s52
      %s74 = sphi 0, %s76
      %s77 = sphi 0, %s74
      %s78 = sphi 0, %s77
      %s94 = sphi 0, %s78
      %s98 = sphi 0, %s98
      %s100 = sphi 0, %s98
      %s101 = sphi 0, %s100
      %s115 = sphi 0, %s101
      %s119 = sphi 0, %s119
      %s121 = sphi 0, %s119
      %s122 = sphi 0, %s121
      %s136 = sphi 0, %s122
      %s142 = sphi 0, %s144
      %s145 = sphi 0, %s142
      %s146 = sphi 0, %s145
      %s162 = sphi 0, %s146
      %s168 = sphi 0, %s170
      %s171 = sphi 0, %s168
      %s172 = sphi 0, %s171
      %s188 = sphi 0, %s172
      %s194 = sphi 0, %s196
      %s197 = sphi 0, %s194
      %s198 = sphi 0, %s197
      %s214 = sphi 0, %s198
      %s220 = sphi 0, %s222
      %s223 = sphi 0, %s220
      %s224 = sphi 0, %s223
      %s240 = sphi 0, %s224
      %s246 = sphi 0, %s248
      %s249 = sphi 0, %s246
      %s250 = sphi 0, %s249
      %s266 = sphi 0, %s250
      %s272 = sphi 0, %s274
      %s275 = sphi 0, %s272
      %s276 = sphi 0, %s275
      %s292 = sphi 0, %s276
      %s298 = sphi 0, %s300
      %s301 = sphi 0, %s298
      %s302 = sphi 0, %s301
      %s318 = sphi 0, %s302
      %s324 = sphi 0, %s326
      %s327 = sphi 0, %s324
      %s328 = sphi 0, %s327
      %s344 = sphi 0, %s328
      %s350 = sphi 0, %s352
      %s353 = sphi 0, %s350
      %s354 = sphi 0, %s353
      %s370 = sphi 0, %s354
      %s376 = sphi 0, %s378
      %s379 = sphi 0, %s376
      %s380 = sphi 0, %s379
      %s396 = sphi 0, %s380
      %s402 = sphi 0, %s404
      %s405 = sphi 0, %s402
      %s406 = sphi 0, %s405
      %s422 = sphi 0, %s406
      %s428 = sphi 0, %s430
      %s431 = sphi 0, %s428
      %s432 = sphi 0, %s431
      %s448 = sphi 0, %s432
      %s454 = sphi 0, %s456
      %s457 = sphi 0, %s454
      %s458 = sphi 0, %s457
      %s474 = sphi 0, %s458
    $region4: #{tpu_custom_call.1} parent=1 // loop_header_branch
      %29 = sbr.rel (%p27) target = $region8
    $region5: #{tpu_custom_call.1} parent=1 // loop_body
      %s31 = ssub.s32 %s26, 1
      %s32 = ssub.s32 %s26, 2
      %s39 = sadd.s32 1, %s34
      %p40 = scmp.ge.s32.totalorder %s39, 2
      %s41 = scalar_select %p40, 0, %s39
      %s42 = sadd.s32 1, %s33
      %s43 = scalar_select %p40, %s42, %s33
      %p44 = scmp.ge.s32.totalorder %s43, 1
      %s45 = scalar_select %p44, 0, %s43
      %s46 = ssub.s32 %s33, %s45
      %p47 = scmp.eq.s32.totalorder %s46, 0
      %s49 = sadd.s32 %s48, 1
      %s50 = scalar_select %p47, %s48, %s49
      %p53 = pneg %p47
      %p54 = scmp.eq.s32.totalorder %s26, 1
      %p55 = por %p53, %p54
      %p56 = scmp.ne.s32.totalorder %s48, %s51
      %p57 = scmp.eq.s32.totalorder %s26, 0
      %p58 = por %p56, %p57
      %p59 = scmp.ne.s32.totalorder %s48, %s51
      %p60 = scmp.eq.s32.totalorder %s31, 1
      %p61 = por %p59, %p60
      %p62 = scmp.ne.s32.totalorder %s51, %s52
      %p63 = scmp.eq.s32.totalorder %s31, 0
      %p64 = por %p62, %p63
      %p65 = scmp.ne.s32.totalorder %s51, %s52
      %p66 = scmp.eq.s32.totalorder %s32, 1
      %p67 = por %p65, %p66
      %p69 = scmp.ne.s32.totalorder %s52, %s68
      %p70 = scmp.eq.s32.totalorder %s32, 0
      %p71 = por %p69, %p70
      %s72 = ssub.s32 %s33, %s45
      %p73 = scmp.eq.s32.totalorder %s72, 0
      %s75 = sadd.s32 %s74, 1
      %s76 = scalar_select %p73, %s74, %s75
      %p79 = pneg %p73
      %p80 = scmp.eq.s32.totalorder %s26, 1
      %p81 = por %p79, %p80
      %p82 = scmp.ne.s32.totalorder %s74, %s77
      %p83 = scmp.eq.s32.totalorder %s26, 0
      %p84 = por %p82, %p83
      %p85 = scmp.ne.s32.totalorder %s74, %s77
      %p86 = scmp.eq.s32.totalorder %s31, 1
      %p87 = por %p85, %p86
      %p88 = scmp.ne.s32.totalorder %s77, %s78
      %p89 = scmp.eq.s32.totalorder %s31, 0
      %p90 = por %p88, %p89
      %p91 = scmp.ne.s32.totalorder %s77, %s78
      %p92 = scmp.eq.s32.totalorder %s32, 1
      %p93 = por %p91, %p92
      %p95 = scmp.ne.s32.totalorder %s78, %s94
      %p96 = scmp.eq.s32.totalorder %s32, 0
      %p97 = por %p95, %p96
      %s99 = sadd.s32 %s98, 1
      %p102 = scmp.eq.s32.totalorder %s26, 1
      %p103 = scmp.ne.s32.totalorder %s98, %s100
      %p104 = scmp.eq.s32.totalorder %s26, 0
      %p105 = por %p103, %p104
      %p106 = scmp.ne.s32.totalorder %s98, %s100
      %p107 = scmp.eq.s32.totalorder %s31, 1
      %p108 = por %p106, %p107
      %p109 = scmp.ne.s32.totalorder %s100, %s101
      %p110 = scmp.eq.s32.totalorder %s31, 0
      %p111 = por %p109, %p110
      %p112 = scmp.ne.s32.totalorder %s100, %s101
      %p113 = scmp.eq.s32.totalorder %s32, 1
      %p114 = por %p112, %p113
      %p116 = scmp.ne.s32.totalorder %s101, %s115
      %p117 = scmp.eq.s32.totalorder %s32, 0
      %p118 = por %p116, %p117
      %s120 = sadd.s32 %s119, 1
      %p123 = scmp.eq.s32.totalorder %s26, 1
      %p124 = scmp.ne.s32.totalorder %s119, %s121
      %p125 = scmp.eq.s32.totalorder %s26, 0
      %p126 = por %p124, %p125
      %p127 = scmp.ne.s32.totalorder %s119, %s121
      %p128 = scmp.eq.s32.totalorder %s31, 1
      %p129 = por %p127, %p128
      %p130 = scmp.ne.s32.totalorder %s121, %s122
      %p131 = scmp.eq.s32.totalorder %s31, 0
      %p132 = por %p130, %p131
      %p133 = scmp.ne.s32.totalorder %s121, %s122
      %p134 = scmp.eq.s32.totalorder %s32, 1
      %p135 = por %p133, %p134
      %p137 = scmp.ne.s32.totalorder %s122, %s136
      %p138 = scmp.eq.s32.totalorder %s32, 0
      %p139 = por %p137, %p138
      %s140 = ssub.s32 %s34, %s41
      %p141 = scmp.eq.s32.totalorder %s140, 0
      %s143 = sadd.s32 %s142, 1
      %s144 = scalar_select %p141, %s142, %s143
      %p147 = pneg %p141
      %p148 = scmp.eq.s32.totalorder %s26, 1
      %p149 = por %p147, %p148
      %p150 = scmp.ne.s32.totalorder %s142, %s145
      %p151 = scmp.eq.s32.totalorder %s26, 0
      %p152 = por %p150, %p151
      %p153 = scmp.ne.s32.totalorder %s142, %s145
      %p154 = scmp.eq.s32.totalorder %s31, 1
      %p155 = por %p153, %p154
      %p156 = scmp.ne.s32.totalorder %s145, %s146
      %p157 = scmp.eq.s32.totalorder %s31, 0
      %p158 = por %p156, %p157
      %p159 = scmp.ne.s32.totalorder %s145, %s146
      %p160 = scmp.eq.s32.totalorder %s32, 1
      %p161 = por %p159, %p160
      %p163 = scmp.ne.s32.totalorder %s146, %s162
      %p164 = scmp.eq.s32.totalorder %s32, 0
      %p165 = por %p163, %p164
      %s166 = ssub.s32 %s34, %s41
      %p167 = scmp.eq.s32.totalorder %s166, 0
      %s169 = sadd.s32 %s168, 1
      %s170 = scalar_select %p167, %s168, %s169
      %p173 = pneg %p167
      %p174 = scmp.eq.s32.totalorder %s26, 1
      %p175 = por %p173, %p174
      %p176 = scmp.ne.s32.totalorder %s168, %s171
      %p177 = scmp.eq.s32.totalorder %s26, 0
      %p178 = por %p176, %p177
      %p179 = scmp.ne.s32.totalorder %s168, %s171
      %p180 = scmp.eq.s32.totalorder %s31, 1
      %p181 = por %p179, %p180
      %p182 = scmp.ne.s32.totalorder %s171, %s172
      %p183 = scmp.eq.s32.totalorder %s31, 0
      %p184 = por %p182, %p183
      %p185 = scmp.ne.s32.totalorder %s171, %s172
      %p186 = scmp.eq.s32.totalorder %s32, 1
      %p187 = por %p185, %p186
      %p189 = scmp.ne.s32.totalorder %s172, %s188
      %p190 = scmp.eq.s32.totalorder %s32, 0
      %p191 = por %p189, %p190
      %s192 = ssub.s32 %s34, %s41
      %p193 = scmp.eq.s32.totalorder %s192, 0
      %s195 = sadd.s32 %s194, 1
      %s196 = scalar_select %p193, %s194, %s195
      %p199 = pneg %p193
      %p200 = scmp.eq.s32.totalorder %s26, 1
      %p201 = por %p199, %p200
      %p202 = scmp.ne.s32.totalorder %s194, %s197
      %p203 = scmp.eq.s32.totalorder %s26, 0
      %p204 = por %p202, %p203
      %p205 = scmp.ne.s32.totalorder %s194, %s197
      %p206 = scmp.eq.s32.totalorder %s31, 1
      %p207 = por %p205, %p206
      %p208 = scmp.ne.s32.totalorder %s197, %s198
      %p209 = scmp.eq.s32.totalorder %s31, 0
      %p210 = por %p208, %p209
      %p211 = scmp.ne.s32.totalorder %s197, %s198
      %p212 = scmp.eq.s32.totalorder %s32, 1
      %p213 = por %p211, %p212
      %p215 = scmp.ne.s32.totalorder %s198, %s214
      %p216 = scmp.eq.s32.totalorder %s32, 0
      %p217 = por %p215, %p216
      %s218 = ssub.s32 %s34, %s41
      %p219 = scmp.eq.s32.totalorder %s218, 0
      %s221 = sadd.s32 %s220, 1
      %s222 = scalar_select %p219, %s220, %s221
      %p225 = pneg %p219
      %p226 = scmp.eq.s32.totalorder %s26, 1
      %p227 = por %p225, %p226
      %p228 = scmp.ne.s32.totalorder %s220, %s223
      %p229 = scmp.eq.s32.totalorder %s26, 0
      %p230 = por %p228, %p229
      %p231 = scmp.ne.s32.totalorder %s220, %s223
      %p232 = scmp.eq.s32.totalorder %s31, 1
      %p233 = por %p231, %p232
      %p234 = scmp.ne.s32.totalorder %s223, %s224
      %p235 = scmp.eq.s32.totalorder %s31, 0
      %p236 = por %p234, %p235
      %p237 = scmp.ne.s32.totalorder %s223, %s224
      %p238 = scmp.eq.s32.totalorder %s32, 1
      %p239 = por %p237, %p238
      %p241 = scmp.ne.s32.totalorder %s224, %s240
      %p242 = scmp.eq.s32.totalorder %s32, 0
      %p243 = por %p241, %p242
      %s244 = ssub.s32 %s34, %s41
      %p245 = scmp.eq.s32.totalorder %s244, 0
      %s247 = sadd.s32 %s246, 1
      %s248 = scalar_select %p245, %s246, %s247
      %p251 = pneg %p245
      %p252 = scmp.eq.s32.totalorder %s26, 1
      %p253 = por %p251, %p252
      %p254 = scmp.ne.s32.totalorder %s246, %s249
      %p255 = scmp.eq.s32.totalorder %s26, 0
      %p256 = por %p254, %p255
      %p257 = scmp.ne.s32.totalorder %s246, %s249
      %p258 = scmp.eq.s32.totalorder %s31, 1
      %p259 = por %p257, %p258
      %p260 = scmp.ne.s32.totalorder %s249, %s250
      %p261 = scmp.eq.s32.totalorder %s31, 0
      %p262 = por %p260, %p261
      %p263 = scmp.ne.s32.totalorder %s249, %s250
      %p264 = scmp.eq.s32.totalorder %s32, 1
      %p265 = por %p263, %p264
      %p267 = scmp.ne.s32.totalorder %s250, %s266
      %p268 = scmp.eq.s32.totalorder %s32, 0
      %p269 = por %p267, %p268
      %s270 = ssub.s32 %s34, %s41
      %p271 = scmp.eq.s32.totalorder %s270, 0
      %s273 = sadd.s32 %s272, 1
      %s274 = scalar_select %p271, %s272, %s273
      %p277 = pneg %p271
      %p278 = scmp.eq.s32.totalorder %s26, 1
      %p279 = por %p277, %p278
      %p280 = scmp.ne.s32.totalorder %s272, %s275
      %p281 = scmp.eq.s32.totalorder %s26, 0
      %p282 = por %p280, %p281
      %p283 = scmp.ne.s32.totalorder %s272, %s275
      %p284 = scmp.eq.s32.totalorder %s31, 1
      %p285 = por %p283, %p284
      %p286 = scmp.ne.s32.totalorder %s275, %s276
      %p287 = scmp.eq.s32.totalorder %s31, 0
      %p288 = por %p286, %p287
      %p289 = scmp.ne.s32.totalorder %s275, %s276
      %p290 = scmp.eq.s32.totalorder %s32, 1
      %p291 = por %p289, %p290
      %p293 = scmp.ne.s32.totalorder %s276, %s292
      %p294 = scmp.eq.s32.totalorder %s32, 0
      %p295 = por %p293, %p294
      %s296 = ssub.s32 %s34, %s41
      %p297 = scmp.eq.s32.totalorder %s296, 0
      %s299 = sadd.s32 %s298, 1
      %s300 = scalar_select %p297, %s298, %s299
      %p303 = pneg %p297
      %p304 = scmp.eq.s32.totalorder %s26, 1
      %p305 = por %p303, %p304
      %p306 = scmp.ne.s32.totalorder %s298, %s301
      %p307 = scmp.eq.s32.totalorder %s26, 0
      %p308 = por %p306, %p307
      %p309 = scmp.ne.s32.totalorder %s298, %s301
      %p310 = scmp.eq.s32.totalorder %s31, 1
      %p311 = por %p309, %p310
      %p312 = scmp.ne.s32.totalorder %s301, %s302
      %p313 = scmp.eq.s32.totalorder %s31, 0
      %p314 = por %p312, %p313
      %p315 = scmp.ne.s32.totalorder %s301, %s302
      %p316 = scmp.eq.s32.totalorder %s32, 1
      %p317 = por %p315, %p316
      %p319 = scmp.ne.s32.totalorder %s302, %s318
      %p320 = scmp.eq.s32.totalorder %s32, 0
      %p321 = por %p319, %p320
      %s322 = ssub.s32 %s34, %s41
      %p323 = scmp.eq.s32.totalorder %s322, 0
      %s325 = sadd.s32 %s324, 1
      %s326 = scalar_select %p323, %s324, %s325
      %p329 = pneg %p323
      %p330 = scmp.eq.s32.totalorder %s26, 1
      %p331 = por %p329, %p330
      %p332 = scmp.ne.s32.totalorder %s324, %s327
      %p333 = scmp.eq.s32.totalorder %s26, 0
      %p334 = por %p332, %p333
      %p335 = scmp.ne.s32.totalorder %s324, %s327
      %p336 = scmp.eq.s32.totalorder %s31, 1
      %p337 = por %p335, %p336
      %p338 = scmp.ne.s32.totalorder %s327, %s328
      %p339 = scmp.eq.s32.totalorder %s31, 0
      %p340 = por %p338, %p339
      %p341 = scmp.ne.s32.totalorder %s327, %s328
      %p342 = scmp.eq.s32.totalorder %s32, 1
      %p343 = por %p341, %p342
      %p345 = scmp.ne.s32.totalorder %s328, %s344
      %p346 = scmp.eq.s32.totalorder %s32, 0
      %p347 = por %p345, %p346
      %s348 = ssub.s32 %s34, %s41
      %p349 = scmp.eq.s32.totalorder %s348, 0
      %s351 = sadd.s32 %s350, 1
      %s352 = scalar_select %p349, %s350, %s351
      %p355 = pneg %p349
      %p356 = scmp.eq.s32.totalorder %s26, 1
      %p357 = por %p355, %p356
      %p358 = scmp.ne.s32.totalorder %s350, %s353
      %p359 = scmp.eq.s32.totalorder %s26, 0
      %p360 = por %p358, %p359
      %p361 = scmp.ne.s32.totalorder %s350, %s353
      %p362 = scmp.eq.s32.totalorder %s31, 1
      %p363 = por %p361, %p362
      %p364 = scmp.ne.s32.totalorder %s353, %s354
      %p365 = scmp.eq.s32.totalorder %s31, 0
      %p366 = por %p364, %p365
      %p367 = scmp.ne.s32.totalorder %s353, %s354
      %p368 = scmp.eq.s32.totalorder %s32, 1
      %p369 = por %p367, %p368
      %p371 = scmp.ne.s32.totalorder %s354, %s370
      %p372 = scmp.eq.s32.totalorder %s32, 0
      %p373 = por %p371, %p372
      %s374 = ssub.s32 %s34, %s41
      %p375 = scmp.eq.s32.totalorder %s374, 0
      %s377 = sadd.s32 %s376, 1
      %s378 = scalar_select %p375, %s376, %s377
      %p381 = pneg %p375
      %p382 = scmp.eq.s32.totalorder %s26, 1
      %p383 = por %p381, %p382
      %p384 = scmp.ne.s32.totalorder %s376, %s379
      %p385 = scmp.eq.s32.totalorder %s26, 0
      %p386 = por %p384, %p385
      %p387 = scmp.ne.s32.totalorder %s376, %s379
      %p388 = scmp.eq.s32.totalorder %s31, 1
      %p389 = por %p387, %p388
      %p390 = scmp.ne.s32.totalorder %s379, %s380
      %p391 = scmp.eq.s32.totalorder %s31, 0
      %p392 = por %p390, %p391
      %p393 = scmp.ne.s32.totalorder %s379, %s380
      %p394 = scmp.eq.s32.totalorder %s32, 1
      %p395 = por %p393, %p394
      %p397 = scmp.ne.s32.totalorder %s380, %s396
      %p398 = scmp.eq.s32.totalorder %s32, 0
      %p399 = por %p397, %p398
      %s400 = ssub.s32 %s34, %s41
      %p401 = scmp.eq.s32.totalorder %s400, 0
      %s403 = sadd.s32 %s402, 1
      %s404 = scalar_select %p401, %s402, %s403
      %p407 = pneg %p401
      %p408 = scmp.eq.s32.totalorder %s26, 1
      %p409 = por %p407, %p408
      %p410 = scmp.ne.s32.totalorder %s402, %s405
      %p411 = scmp.eq.s32.totalorder %s26, 0
      %p412 = por %p410, %p411
      %p413 = scmp.ne.s32.totalorder %s402, %s405
      %p414 = scmp.eq.s32.totalorder %s31, 1
      %p415 = por %p413, %p414
      %p416 = scmp.ne.s32.totalorder %s405, %s406
      %p417 = scmp.eq.s32.totalorder %s31, 0
      %p418 = por %p416, %p417
      %p419 = scmp.ne.s32.totalorder %s405, %s406
      %p420 = scmp.eq.s32.totalorder %s32, 1
      %p421 = por %p419, %p420
      %p423 = scmp.ne.s32.totalorder %s406, %s422
      %p424 = scmp.eq.s32.totalorder %s32, 0
      %p425 = por %p423, %p424
      %s426 = ssub.s32 %s34, %s41
      %p427 = scmp.eq.s32.totalorder %s426, 0
      %s429 = sadd.s32 %s428, 1
      %s430 = scalar_select %p427, %s428, %s429
      %p433 = pneg %p427
      %p434 = scmp.eq.s32.totalorder %s26, 1
      %p435 = por %p433, %p434
      %p436 = scmp.ne.s32.totalorder %s428, %s431
      %p437 = scmp.eq.s32.totalorder %s26, 0
      %p438 = por %p436, %p437
      %p439 = scmp.ne.s32.totalorder %s428, %s431
      %p440 = scmp.eq.s32.totalorder %s31, 1
      %p441 = por %p439, %p440
      %p442 = scmp.ne.s32.totalorder %s431, %s432
      %p443 = scmp.eq.s32.totalorder %s31, 0
      %p444 = por %p442, %p443
      %p445 = scmp.ne.s32.totalorder %s431, %s432
      %p446 = scmp.eq.s32.totalorder %s32, 1
      %p447 = por %p445, %p446
      %p449 = scmp.ne.s32.totalorder %s432, %s448
      %p450 = scmp.eq.s32.totalorder %s32, 0
      %p451 = por %p449, %p450
      %s452 = ssub.s32 %s33, %s45
      %p453 = scmp.eq.s32.totalorder %s452, 0
      %s455 = sadd.s32 %s454, 1
      %s456 = scalar_select %p453, %s454, %s455
      %p459 = pneg %p453
      %p460 = scmp.eq.s32.totalorder %s26, 1
      %p461 = por %p459, %p460
      %p462 = scmp.ne.s32.totalorder %s454, %s457
      %p463 = scmp.eq.s32.totalorder %s26, 0
      %p464 = por %p462, %p463
      %p465 = scmp.ne.s32.totalorder %s454, %s457
      %p466 = scmp.eq.s32.totalorder %s31, 1
      %p467 = por %p465, %p466
      %p468 = scmp.ne.s32.totalorder %s457, %s458
      %p469 = scmp.eq.s32.totalorder %s31, 0
      %p470 = por %p468, %p469
      %p471 = scmp.ne.s32.totalorder %s457, %s458
      %p472 = scmp.eq.s32.totalorder %s32, 1
      %p473 = por %p471, %p472
      %p475 = scmp.ne.s32.totalorder %s458, %s474
      %p476 = scmp.eq.s32.totalorder %s32, 0
      %p477 = por %p475, %p476
      %p478 = scmp.le.s32.totalorder 1, %s26
      %p479 = scmp.lt.s32.totalorder %s26, 3
      %p480 = pnand %p478, %p479
      %p481 = pneg %p480
      // Predicated region
      $region9: #{tpu_custom_call.1} parent=5 // pred_check
        _
      $region10: #{tpu_custom_call.1} parent=5 // pred_check_branch
        %483 = sbr.rel (%p480) target = $region12
      $region11: #{tpu_custom_call.1} parent=5 // pred_region
        %s484 = ssub.s32 %s26, 1
        // Predicated region
        $region13: #{tpu_custom_call.1} parent=11 // pred_check
          %p485 = pneg %p64
        $region14: #{tpu_custom_call.1} parent=11 // pred_check_branch
          %487 = sbr.rel (%p485) target = $region16
        $region15: #{tpu_custom_call.1} parent=11 // pred_region
          %s488 = smul.u32 2, %s35
          %s490 = ssub.s32 256, 256
          %491 = vsyncadd [#allocation5], %s490
          %s492 = smul.addr %s488, 128
          %s493 = scalar_lea.hbm %s0, %s492
          %s494 = sshll.u32 [#allocation4], 4
          %s495 = int_to_ptr.vmem [resolvable:$true] %s494
          %500 = dma.hbm_to_vmem [thread:$0]  %s493, 256, %s495, [#allocation5], 128, 128, 8
        $region16: #{tpu_custom_call.1} parent=11 // pred_fallthru
          _
        // Predicated region
        $region17: #{tpu_custom_call.1} parent=11 // pred_check
          %p501 = pneg %p90
        $region18: #{tpu_custom_call.1} parent=11 // pred_check_branch
          %503 = sbr.rel (%p501) target = $region20
        $region19: #{tpu_custom_call.1} parent=11 // pred_region
          %s504 = smul.u32 2, %s35
          %s506 = ssub.s32 32, 32
          %507 = vsyncadd [#allocation8], %s506
          %s508 = smul.addr %s504, 16
          %s509 = scalar_lea.hbm %s1, %s508
          %s510 = sshll.u32 [#allocation7], 4
          %s511 = int_to_ptr.vmem [resolvable:$true] %s510
          %516 = dma.hbm_to_vmem [thread:$0]  %s509, 32, %s511, [#allocation8], 16, 16, 1
        $region20: #{tpu_custom_call.1} parent=11 // pred_fallthru
          _
        // Predicated region
        $region21: #{tpu_custom_call.1} parent=11 // pred_check
          %p517 = pneg %p111
        $region22: #{tpu_custom_call.1} parent=11 // pred_check_branch
          %519 = sbr.rel (%p517) target = $region24
        $region23: #{tpu_custom_call.1} parent=11 // pred_region
          %s521 = ssub.s32 16, 16
          %522 = vsyncadd [#allocation8], %s521
          %s524 = sshll.u32 [#allocation9], 4
          %s525 = int_to_ptr.vmem [resolvable:$true] %s524
          %527 = dma.hbm_to_vmem [thread:$0]  %s2, 16, %s525, [#allocation8]
        $region24: #{tpu_custom_call.1} parent=11 // pred_fallthru
          _
        // Predicated region
        $region25: #{tpu_custom_call.1} parent=11 // pred_check
          %p528 = pneg %p132
        $region26: #{tpu_custom_call.1} parent=11 // pred_check_branch
          %530 = sbr.rel (%p528) target = $region28
        $region27: #{tpu_custom_call.1} parent=11 // pred_region
          %s532 = ssub.s32 16, 16
          %533 = vsyncadd [#allocation11], %s532
          %s535 = sshll.u32 [#allocation10], 4
          %s536 = int_to_ptr.vmem [resolvable:$true] %s535
          %538 = dma.hbm_to_vmem [thread:$0]  %s3, 16, %s536, [#allocation11]
        $region28: #{tpu_custom_call.1} parent=11 // pred_fallthru
          _
      $region12: #{tpu_custom_call.1} parent=5 // pred_fallthru
        _
      %p539 = scmp.lt.s32.totalorder %s26, 2
      // Predicated region
      $region29: #{tpu_custom_call.1} parent=5 // pred_check
        %p540 = pneg %p539
      $region30: #{tpu_custom_call.1} parent=5 // pred_check_branch
        %542 = sbr.rel (%p540) target = $region32
      $region31: #{tpu_custom_call.1} parent=5 // pred_region
        // Predicated region
        $region33: #{tpu_custom_call.1} parent=31 // pred_check
          %p543 = pneg %p152
        $region34: #{tpu_custom_call.1} parent=31 // pred_check_branch
          %545 = sbr.rel (%p543) target = $region36
        $region35: #{tpu_custom_call.1} parent=31 // pred_region
          %s546 = sand.u32 %s26, 1
          %s547 = scalar_lea.sflag [#allocation5], %s546
          %s548 = sand.u32 %s142, 1
          %s549 = smul.addr %s548, 192
          %s550 = scalar_lea.vmem [#allocation12], %s549
          %s552 = ssub.s32 3072, 3072
          %553 = vsyncadd %s547, %s552
          %s554 = smul.addr %s34, 48
          %s555 = smul.addr %s554, 64
          %s556 = scalar_lea.hbm %s4, %s555
          %s557 = sshll.u32 %s550, 4
          %s558 = int_to_ptr.vmem [resolvable:$true] %s557
          %563 = dma.hbm_to_vmem [thread:$0]  %s556, 3072, %s558, %s547, 192, 192, 12
        $region36: #{tpu_custom_call.1} parent=31 // pred_fallthru
          _
        // Predicated region
        $region37: #{tpu_custom_call.1} parent=31 // pred_check
          %p564 = pneg %p178
        $region38: #{tpu_custom_call.1} parent=31 // pred_check_branch
          %566 = sbr.rel (%p564) target = $region40
        $region39: #{tpu_custom_call.1} parent=31 // pred_region
          %p567 = scmp.lt.s32.totalorder %s34, 1
          %s568 = scalar_select %p567, %s34, 1
          %s569 = smul.addr %s568, 3
          %s570 = scalar_lea.vmem %s5, %s569
        $region40: #{tpu_custom_call.1} parent=31 // pred_fallthru
          _
        // Predicated region
        $region41: #{tpu_custom_call.1} parent=31 // pred_check
          %p571 = pneg %p204
        $region42: #{tpu_custom_call.1} parent=31 // pred_check_branch
          %573 = sbr.rel (%p571) target = $region44
        $region43: #{tpu_custom_call.1} parent=31 // pred_region
          %s574 = sand.u32 %s26, 1
          %s575 = scalar_lea.sflag [#allocation5], %s574
          %s576 = sand.u32 %s194, 1
          %s577 = smul.addr %s576, 64
          %s578 = scalar_lea.vmem [#allocation13], %s577
          %s580 = ssub.s32 1024, 1024
          %581 = vsyncadd %s575, %s580
          %s582 = smul.addr %s34, 16
          %s583 = smul.addr %s582, 64
          %s584 = scalar_lea.hbm %s6, %s583
          %s585 = sshll.u32 %s578, 4
          %s586 = int_to_ptr.vmem [resolvable:$true] %s585
          %591 = dma.hbm_to_vmem [thread:$0]  %s584, 1024, %s586, %s575, 64, 64, 4
        $region44: #{tpu_custom_call.1} parent=31 // pred_fallthru
          _
        // Predicated region
        $region45: #{tpu_custom_call.1} parent=31 // pred_check
          %p592 = pneg %p230
        $region46: #{tpu_custom_call.1} parent=31 // pred_check_branch
          %594 = sbr.rel (%p592) target = $region48
        $region47: #{tpu_custom_call.1} parent=31 // pred_region
          %p595 = scmp.lt.s32.totalorder %s34, 1
          %s596 = scalar_select %p595, %s34, 1
          %s597 = scalar_lea.vmem %s7, %s596
        $region48: #{tpu_custom_call.1} parent=31 // pred_fallthru
          _
        // Predicated region
        $region49: #{tpu_custom_call.1} parent=31 // pred_check
          %p598 = pneg %p256
        $region50: #{tpu_custom_call.1} parent=31 // pred_check_branch
          %600 = sbr.rel (%p598) target = $region52
        $region51: #{tpu_custom_call.1} parent=31 // pred_region
          %p601 = scmp.lt.s32.totalorder %s34, 1
          %s602 = scalar_select %p601, %s34, 1
          %s603 = scalar_lea.vmem %s8, %s602
        $region52: #{tpu_custom_call.1} parent=31 // pred_fallthru
          _
        // Predicated region
        $region53: #{tpu_custom_call.1} parent=31 // pred_check
          %p604 = pneg %p282
        $region54: #{tpu_custom_call.1} parent=31 // pred_check_branch
          %606 = sbr.rel (%p604) target = $region56
        $region55: #{tpu_custom_call.1} parent=31 // pred_region
          %p607 = scmp.lt.s32.totalorder %s34, 1
          %s608 = scalar_select %p607, %s34, 1
          %s609 = scalar_lea.vmem %s9, %s608
        $region56: #{tpu_custom_call.1} parent=31 // pred_fallthru
          _
        // Predicated region
        $region57: #{tpu_custom_call.1} parent=31 // pred_check
          %p610 = pneg %p308
        $region58: #{tpu_custom_call.1} parent=31 // pred_check_branch
          %612 = sbr.rel (%p610) target = $region60
        $region59: #{tpu_custom_call.1} parent=31 // pred_region
          %s613 = sand.u32 %s26, 1
          %s614 = scalar_lea.sflag [#allocation5], %s613
          %s615 = sand.u32 %s298, 1
          %s616 = smul.addr %s615, 128
          %s617 = scalar_lea.vmem [#allocation14], %s616
          %s619 = ssub.s32 2048, 2048
          %620 = vsyncadd %s614, %s619
          %s621 = smul.addr %s34, 32
          %s622 = smul.addr %s621, 64
          %s623 = scalar_lea.hbm %s10, %s622
          %s624 = sshll.u32 %s617, 4
          %s625 = int_to_ptr.vmem [resolvable:$true] %s624
          %630 = dma.hbm_to_vmem [thread:$0]  %s623, 2048, %s625, %s614, 128, 128, 8
        $region60: #{tpu_custom_call.1} parent=31 // pred_fallthru
          _
        // Predicated region
        $region61: #{tpu_custom_call.1} parent=31 // pred_check
          %p631 = pneg %p334
        $region62: #{tpu_custom_call.1} parent=31 // pred_check_branch
          %633 = sbr.rel (%p631) target = $region64
        $region63: #{tpu_custom_call.1} parent=31 // pred_region
          %p634 = scmp.lt.s32.totalorder %s34, 1
          %s635 = scalar_select %p634, %s34, 1
          %s636 = smul.addr %s635, 2
          %s637 = scalar_lea.vmem %s11, %s636
        $region64: #{tpu_custom_call.1} parent=31 // pred_fallthru
          _
        // Predicated region
        $region65: #{tpu_custom_call.1} parent=31 // pred_check
          %p638 = pneg %p360
        $region66: #{tpu_custom_call.1} parent=31 // pred_check_branch
          %640 = sbr.rel (%p638) target = $region68
        $region67: #{tpu_custom_call.1} parent=31 // pred_region
          %s641 = sand.u32 %s26, 1
          %s642 = scalar_lea.sflag [#allocation5], %s641
          %s643 = sand.u32 %s350, 1
          %s644 = smul.addr %s643, 128
          %s645 = scalar_lea.vmem [#allocation15], %s644
          %s647 = ssub.s32 2048, 2048
          %648 = vsyncadd %s642, %s647
          %s649 = smul.addr %s34, 32
          %s650 = smul.addr %s649, 64
          %s651 = scalar_lea.hbm %s12, %s650
          %s652 = sshll.u32 %s645, 4
          %s653 = int_to_ptr.vmem [resolvable:$true] %s652
          %658 = dma.hbm_to_vmem [thread:$0]  %s651, 2048, %s653, %s642, 64, 64, 4
        $region68: #{tpu_custom_call.1} parent=31 // pred_fallthru
          _
        // Predicated region
        $region69: #{tpu_custom_call.1} parent=31 // pred_check
          %p659 = pneg %p386
        $region70: #{tpu_custom_call.1} parent=31 // pred_check_branch
          %661 = sbr.rel (%p659) target = $region72
        $region71: #{tpu_custom_call.1} parent=31 // pred_region
          %p662 = scmp.lt.s32.totalorder %s34, 1
          %s663 = scalar_select %p662, %s34, 1
          %s664 = scalar_lea.vmem %s13, %s663
        $region72: #{tpu_custom_call.1} parent=31 // pred_fallthru
          _
        // Predicated region
        $region73: #{tpu_custom_call.1} parent=31 // pred_check
          %p665 = pneg %p412
        $region74: #{tpu_custom_call.1} parent=31 // pred_check_branch
          %667 = sbr.rel (%p665) target = $region76
        $region75: #{tpu_custom_call.1} parent=31 // pred_region
          %p668 = scmp.lt.s32.totalorder %s34, 1
          %s669 = scalar_select %p668, %s34, 1
          %s670 = scalar_lea.vmem %s14, %s669
        $region76: #{tpu_custom_call.1} parent=31 // pred_fallthru
          _
        // Predicated region
        $region77: #{tpu_custom_call.1} parent=31 // pred_check
          %p671 = pneg %p438
        $region78: #{tpu_custom_call.1} parent=31 // pred_check_branch
          %673 = sbr.rel (%p671) target = $region80
        $region79: #{tpu_custom_call.1} parent=31 // pred_region
          %p674 = scmp.lt.s32.totalorder %s34, 1
          %s675 = scalar_select %p674, %s34, 1
          %s676 = scalar_lea.vmem %s15, %s675
        $region80: #{tpu_custom_call.1} parent=31 // pred_fallthru
          _
      $region32: #{tpu_custom_call.1} parent=5 // pred_fallthru
        _
      %p677 = scmp.le.s32.totalorder 1, %s26
      %p678 = scmp.lt.s32.totalorder %s26, 3
      %p679 = pnand %p677, %p678
      %p680 = pneg %p679
      // Predicated region
      $region81: #{tpu_custom_call.1} parent=5 // pred_check
        _
      $region82: #{tpu_custom_call.1} parent=5 // pred_check_branch
        %682 = sbr.rel (%p679) target = $region84
      $region83: #{tpu_custom_call.1} parent=5 // pred_region
        %s683 = ssub.s32 %s26, 1
        // Predicated region
        $region85: #{tpu_custom_call.1} parent=83 // pred_check
          %p684 = pneg %p64
        $region86: #{tpu_custom_call.1} parent=83 // pred_check_branch
          %686 = sbr.rel (%p684) target = $region88
        $region87: #{tpu_custom_call.1} parent=83 // pred_region
          %687 = dma.done [#allocation5], 256
        $region88: #{tpu_custom_call.1} parent=83 // pred_fallthru
          _
        // Predicated region
        $region89: #{tpu_custom_call.1} parent=83 // pred_check
          %p688 = pneg %p90
        $region90: #{tpu_custom_call.1} parent=83 // pred_check_branch
          %690 = sbr.rel (%p688) target = $region92
        $region91: #{tpu_custom_call.1} parent=83 // pred_region
          %691 = dma.done [#allocation8], 32
        $region92: #{tpu_custom_call.1} parent=83 // pred_fallthru
          _
        // Predicated region
        $region93: #{tpu_custom_call.1} parent=83 // pred_check
          %p692 = pneg %p111
        $region94: #{tpu_custom_call.1} parent=83 // pred_check_branch
          %694 = sbr.rel (%p692) target = $region96
        $region95: #{tpu_custom_call.1} parent=83 // pred_region
          %695 = dma.done [#allocation8], 16
        $region96: #{tpu_custom_call.1} parent=83 // pred_fallthru
          _
        // Predicated region
        $region97: #{tpu_custom_call.1} parent=83 // pred_check
          %p696 = pneg %p132
        $region98: #{tpu_custom_call.1} parent=83 // pred_check_branch
          %698 = sbr.rel (%p696) target = $region100
        $region99: #{tpu_custom_call.1} parent=83 // pred_region
          %699 = dma.done [#allocation11], 16
        $region100: #{tpu_custom_call.1} parent=83 // pred_fallthru
          _
        %s700 = sand.u32 %s31, 1
        %s701 = scalar_lea.sflag [#allocation5], %s700
        %s702 = sand.u32 %s145, 1
        %s703 = smul.addr %s702, 192
        %s704 = scalar_lea.vmem [#allocation12], %s703
        // Predicated region
        $region101: #{tpu_custom_call.1} parent=83 // pred_check
          %p705 = pneg %p158
        $region102: #{tpu_custom_call.1} parent=83 // pred_check_branch
          %707 = sbr.rel (%p705) target = $region104
        $region103: #{tpu_custom_call.1} parent=83 // pred_region
          %708 = dma.done %s701, 3072
        $region104: #{tpu_custom_call.1} parent=83 // pred_fallthru
          _
        %s709 = sand.u32 %s31, 1
        %s710 = scalar_lea.sflag [#allocation5], %s709
        %s711 = sand.u32 %s197, 1
        %s712 = smul.addr %s711, 64
        %s713 = scalar_lea.vmem [#allocation13], %s712
        // Predicated region
        $region105: #{tpu_custom_call.1} parent=83 // pred_check
          %p714 = pneg %p210
        $region106: #{tpu_custom_call.1} parent=83 // pred_check_branch
          %716 = sbr.rel (%p714) target = $region108
        $region107: #{tpu_custom_call.1} parent=83 // pred_region
          %717 = dma.done %s710, 1024
        $region108: #{tpu_custom_call.1} parent=83 // pred_fallthru
          _
        %s718 = sand.u32 %s31, 1
        %s719 = scalar_lea.sflag [#allocation5], %s718
        %s720 = sand.u32 %s301, 1
        %s721 = smul.addr %s720, 128
        %s722 = scalar_lea.vmem [#allocation14], %s721
        // Predicated region
        $region109: #{tpu_custom_call.1} parent=83 // pred_check
          %p723 = pneg %p314
        $region110: #{tpu_custom_call.1} parent=83 // pred_check_branch
          %725 = sbr.rel (%p723) target = $region112
        $region111: #{tpu_custom_call.1} parent=83 // pred_region
          %726 = dma.done %s719, 2048
        $region112: #{tpu_custom_call.1} parent=83 // pred_fallthru
          _
        %s727 = sand.u32 %s31, 1
        %s728 = scalar_lea.sflag [#allocation5], %s727
        %s729 = sand.u32 %s353, 1
        %s730 = smul.addr %s729, 128
        %s731 = scalar_lea.vmem [#allocation15], %s730
        // Predicated region
        $region113: #{tpu_custom_call.1} parent=83 // pred_check
          %p732 = pneg %p366
        $region114: #{tpu_custom_call.1} parent=83 // pred_check_branch
          %734 = sbr.rel (%p732) target = $region116
        $region115: #{tpu_custom_call.1} parent=83 // pred_region
          %735 = dma.done %s728, 2048
        $region116: #{tpu_custom_call.1} parent=83 // pred_fallthru
          _
        %p736 = pneg %p64
        %p737 = pneg %p61
        %p738 = pneg %p90
        %p739 = pneg %p87
        %p740 = pneg %p111
        %p741 = pneg %p108
        %p742 = pneg %p132
        %p743 = pneg %p129
        %s744 = sand.u32 %s31, 1
        %s745 = scalar_lea.sflag [#allocation5], %s744
        %s746 = sand.u32 %s145, 1
        %s747 = smul.addr %s746, 192
        %s748 = scalar_lea.vmem [#allocation12], %s747
        %p749 = pneg %p158
        %p750 = pneg %p155
        %p751 = scmp.lt.s32.totalorder %s36, 1
        %s752 = scalar_select %p751, %s36, 1
        %s753 = smul.addr %s752, 3
        %s754 = scalar_lea.vmem %s5, %s753
        %p755 = pneg %p184
        %p756 = pneg %p181
        %s757 = sand.u32 %s31, 1
        %s758 = scalar_lea.sflag [#allocation5], %s757
        %s759 = sand.u32 %s197, 1
        %s760 = smul.addr %s759, 64
        %s761 = scalar_lea.vmem [#allocation13], %s760
        %p762 = pneg %p210
        %p763 = pneg %p207
        %p764 = scmp.lt.s32.totalorder %s36, 1
        %s765 = scalar_select %p764, %s36, 1
        %s766 = scalar_lea.vmem %s7, %s765
        %p767 = pneg %p236
        %p768 = pneg %p233
        %p769 = scmp.lt.s32.totalorder %s36, 1
        %s770 = scalar_select %p769, %s36, 1
        %s771 = scalar_lea.vmem %s8, %s770
        %p772 = pneg %p262
        %p773 = pneg %p259
        %p774 = scmp.lt.s32.totalorder %s36, 1
        %s775 = scalar_select %p774, %s36, 1
        %s776 = scalar_lea.vmem %s9, %s775
        %p777 = pneg %p288
        %p778 = pneg %p285
        %s779 = sand.u32 %s31, 1
        %s780 = scalar_lea.sflag [#allocation5], %s779
        %s781 = sand.u32 %s301, 1
        %s782 = smul.addr %s781, 128
        %s783 = scalar_lea.vmem [#allocation14], %s782
        %p784 = pneg %p314
        %p785 = pneg %p311
        %p786 = scmp.lt.s32.totalorder %s36, 1
        %s787 = scalar_select %p786, %s36, 1
        %s788 = smul.addr %s787, 2
        %s789 = scalar_lea.vmem %s11, %s788
        %p790 = pneg %p340
        %p791 = pneg %p337
        %s792 = sand.u32 %s31, 1
        %s793 = scalar_lea.sflag [#allocation5], %s792
        %s794 = sand.u32 %s353, 1
        %s795 = smul.addr %s794, 128
        %s796 = scalar_lea.vmem [#allocation15], %s795
        %p797 = pneg %p366
        %p798 = pneg %p363
        %p799 = scmp.lt.s32.totalorder %s36, 1
        %s800 = scalar_select %p799, %s36, 1
        %s801 = scalar_lea.vmem %s13, %s800
        %p802 = pneg %p392
        %p803 = pneg %p389
        %p804 = scmp.lt.s32.totalorder %s36, 1
        %s805 = scalar_select %p804, %s36, 1
        %s806 = scalar_lea.vmem %s14, %s805
        %p807 = pneg %p418
        %p808 = pneg %p415
        %p809 = scmp.lt.s32.totalorder %s36, 1
        %s810 = scalar_select %p809, %s36, 1
        %s811 = scalar_lea.vmem %s15, %s810
        %p812 = pneg %p444
        %p813 = pneg %p441
        %p814 = pneg %p470
        %p815 = pneg %p467
        %s816 = smul.u32 2, %s35
        %s817 = smul.u32 2, %s35
        %p818 = scmp.lt.s32.totalorder %s36, 1
        %s819 = scalar_select %p818, %s36, 1
        %s820 = smul.addr %s819, 3
        %s821 = scalar_lea.vmem %s5, %s820
        %p822 = scmp.lt.s32.totalorder %s36, 1
        %s823 = scalar_select %p822, %s36, 1
        %s824 = scalar_lea.vmem %s7, %s823
        %p825 = scmp.lt.s32.totalorder %s36, 1
        %s826 = scalar_select %p825, %s36, 1
        %s827 = scalar_lea.vmem %s8, %s826
        %p828 = scmp.lt.s32.totalorder %s36, 1
        %s829 = scalar_select %p828, %s36, 1
        %s830 = scalar_lea.vmem %s9, %s829
        %p831 = scmp.lt.s32.totalorder %s36, 1
        %s832 = scalar_select %p831, %s36, 1
        %s833 = smul.addr %s832, 2
        %s834 = scalar_lea.vmem %s11, %s833
        %p835 = scmp.lt.s32.totalorder %s36, 1
        %s836 = scalar_select %p835, %s36, 1
        %s837 = scalar_lea.vmem %s13, %s836
        %p838 = scmp.lt.s32.totalorder %s36, 1
        %s839 = scalar_select %p838, %s36, 1
        %s840 = scalar_lea.vmem %s14, %s839
        %p841 = scmp.lt.s32.totalorder %s36, 1
        %s842 = scalar_select %p841, %s36, 1
        %s843 = scalar_lea.vmem %s15, %s842
        %s844 = smul.u32 2, %s35
        %p846 = scmp.eq.s32.totalorder %s36, 0
        // Predicated region
        $region117: #{tpu_custom_call.1} parent=83 // pred_check
          %p847 = pneg %p846
        $region118: #{tpu_custom_call.1} parent=83 // pred_check_branch
          %849 = sbr.rel (%p847) target = $region120
        $region119: #{tpu_custom_call.1} parent=83 // pred_region
          %v850 = vld [vmem:[#allocation4] sm:$0xff]
          %v851 = vld [vmem:[#allocation9] sm:$0x1]
          %v852 = vld [vmem:[#allocation10] sm:$0x1]
          %853 = vadd.xlane.f32.xlu0 %v850
          %v854 = vpop.xlane.xlu0 %853
          %v855 = vrcp.pop 128.0
          %v856 = vmul.f32 %v854, %v855
          %v857 = vsub.f32 %v850, %v856
          %v858 = vmul.f32 %v857, %v857
          %859 = vadd.xlane.f32.xlu0 %v858
          %v860 = vpop.xlane.xlu0 %859
          %v861 = vmul.f32 %v860, %v855
          %v862 = vadd.f32 %v861, 1e-12
          %v863 = vrsqrt.pop %v862
          %v864 = vmul.f32 %v857, %v863
          %v866 = vlaneseq
          %v867 = vshrl.u32 %v866, 7
          %v868 = vsub.s32 0, %v867
          %v869 = vrot.slane %v851, %v868
          %v871 = vmul.f32 %v864, %v869
          %v873 = vlaneseq
          %v874 = vshrl.u32 %v873, 7
          %v875 = vsub.s32 0, %v874
          %v876 = vrot.slane %v852, %v875
          %v878 = vadd.f32 %v871, %v876
          %879 = vst [vmem:[#allocation2] sm:$0xff] %v878
          %s880 = scalar_lea.vmem [#allocation4], 8
          %v881 = vld [vmem:[%s880] sm:$0xff]
          %v882 = vld [vmem:[#allocation9] sm:$0x1]
          %v883 = vld [vmem:[#allocation10] sm:$0x1]
          %884 = vadd.xlane.f32.xlu0 %v881
          %v885 = vpop.xlane.xlu0 %884
          %v886 = vmul.f32 %v885, %v855
          %v887 = vsub.f32 %v881, %v886
          %v888 = vmul.f32 %v887, %v887
          %889 = vadd.xlane.f32.xlu0 %v888
          %v890 = vpop.xlane.xlu0 %889
          %v891 = vmul.f32 %v890, %v855
          %v892 = vadd.f32 %v891, 1e-12
          %v893 = vrsqrt.pop %v892
          %v894 = vmul.f32 %v887, %v893
          %v896 = vlaneseq
          %v897 = vshrl.u32 %v896, 7
          %v898 = vsub.s32 0, %v897
          %v899 = vrot.slane %v882, %v898
          %v901 = vmul.f32 %v894, %v899
          %v903 = vlaneseq
          %v904 = vshrl.u32 %v903, 7
          %v905 = vsub.s32 0, %v904
          %v906 = vrot.slane %v883, %v905
          %v908 = vadd.f32 %v901, %v906
          %909 = vst [vmem:[#allocation2 + $0x8] sm:$0xff] %v908
        $region120: #{tpu_custom_call.1} parent=83 // pred_fallthru
          _
        %v910 = vld [vmem:[#allocation2] sm:$0xff]
        %v911 = vld [vmem:[#allocation2 + $0x8] sm:$0xff]
        %v912 = vpack.c.bf16 %v911, %v910
        %v913 = vld [vmem:[%s704] sm:$0xff]
        %v914 = vld [vmem:[%s704 + $0x8] sm:$0xf]
        %v915 = vld [vmem:[%s704 + $0xc] sm:$0xff]
        %v916 = vld [vmem:[%s704 + $0x14] sm:$0xf]
        %v917 = vld [vmem:[%s704 + $0x18] sm:$0xff]
        %v918 = vld [vmem:[%s704 + $0x20] sm:$0xf]
        %v919 = vld [vmem:[%s704 + $0x24] sm:$0xff]
        %v920 = vld [vmem:[%s704 + $0x2c] sm:$0xf]
        %v921 = vld [vmem:[%s704 + $0x30] sm:$0xff]
        %v922 = vld [vmem:[%s704 + $0x38] sm:$0xf]
        %v923 = vld [vmem:[%s704 + $0x3c] sm:$0xff]
        %v924 = vld [vmem:[%s704 + $0x44] sm:$0xf]
        %v925 = vld [vmem:[%s704 + $0x48] sm:$0xff]
        %v926 = vld [vmem:[%s704 + $0x50] sm:$0xf]
        %v927 = vld [vmem:[%s704 + $0x54] sm:$0xff]
        %v928 = vld [vmem:[%s704 + $0x5c] sm:$0xf]
        %v929 = vld [vmem:[%s704 + $0x60] sm:$0xff]
        %v930 = vld [vmem:[%s704 + $0x68] sm:$0xf]
        %v931 = vld [vmem:[%s704 + $0x6c] sm:$0xff]
        %v932 = vld [vmem:[%s704 + $0x74] sm:$0xf]
        %v933 = vld [vmem:[%s704 + $0x78] sm:$0xff]
        %v934 = vld [vmem:[%s704 + $0x80] sm:$0xf]
        %v935 = vld [vmem:[%s704 + $0x84] sm:$0xff]
        %v936 = vld [vmem:[%s704 + $0x8c] sm:$0xf]
        %v937 = vld [vmem:[%s704 + $0x90] sm:$0xff]
        %v938 = vld [vmem:[%s704 + $0x98] sm:$0xf]
        %v939 = vld [vmem:[%s704 + $0x9c] sm:$0xff]
        %v940 = vld [vmem:[%s704 + $0xa4] sm:$0xf]
        %v941 = vld [vmem:[%s704 + $0xa8] sm:$0xff]
        %v942 = vld [vmem:[%s704 + $0xb0] sm:$0xf]
        %v943 = vld [vmem:[%s704 + $0xb4] sm:$0xff]
        %v944 = vld [vmem:[%s704 + $0xbc] sm:$0xf]
        %v945 = vld [vmem:[%s821] sm:$0x7]
        %v947 = vlaneseq
        %v948 = vshrl.u32 %v947, 7
        %v949 = vsub.s32 0, %v948
        %v950 = vrot.slane %v945, %v949
        %v951 = vlaneseq
        %v952 = vshrl.u32 %v951, 7
        %v953 = vsub.s32 1, %v952
        %v954 = vrot.slane %v945, %v953
        %v955 = vlaneseq
        %v956 = vshrl.u32 %v955, 7
        %v957 = vsub.s32 2, %v956
        %v958 = vrot.slane %v945, %v957
        %v994 = vunpack.c.l.b16 %v913
        %v995 = vunpack.c.h.b16 %v913
        %v996 = vunpack.c.l.b16 %v914
        %v997 = vunpack.c.l.b16 %v915
        %v998 = vunpack.c.h.b16 %v915
        %v999 = vunpack.c.l.b16 %v916
        %v1000 = vunpack.c.l.b16 %v917
        %v1001 = vunpack.c.h.b16 %v917
        %v1002 = vunpack.c.l.b16 %v918
        %v1003 = vunpack.c.l.b16 %v919
        %v1004 = vunpack.c.h.b16 %v919
        %v1005 = vunpack.c.l.b16 %v920
        %v1006 = vunpack.c.l.b16 %v921
        %v1007 = vunpack.c.h.b16 %v921
        %v1008 = vunpack.c.l.b16 %v922
        %v1009 = vunpack.c.l.b16 %v923
        %v1010 = vunpack.c.h.b16 %v923
        %v1011 = vunpack.c.l.b16 %v924
        %v1012 = vunpack.c.l.b16 %v925
        %v1013 = vunpack.c.h.b16 %v925
        %v1014 = vunpack.c.l.b16 %v926
        %v1015 = vunpack.c.l.b16 %v927
        %v1016 = vunpack.c.h.b16 %v927
        %v1017 = vunpack.c.l.b16 %v928
        %v1018 = vunpack.c.l.b16 %v929
        %v1019 = vunpack.c.h.b16 %v929
        %v1020 = vunpack.c.l.b16 %v930
        %v1021 = vunpack.c.l.b16 %v931
        %v1022 = vunpack.c.h.b16 %v931
        %v1023 = vunpack.c.l.b16 %v932
        %v1024 = vunpack.c.l.b16 %v933
        %v1025 = vunpack.c.h.b16 %v933
        %v1026 = vunpack.c.l.b16 %v934
        %v1027 = vunpack.c.l.b16 %v935
        %v1028 = vunpack.c.h.b16 %v935
        %v1029 = vunpack.c.l.b16 %v936
        %v1030 = vunpack.c.l.b16 %v937
        %v1031 = vunpack.c.h.b16 %v937
        %v1032 = vunpack.c.l.b16 %v938
        %v1033 = vunpack.c.l.b16 %v939
        %v1034 = vunpack.c.h.b16 %v939
        %v1035 = vunpack.c.l.b16 %v940
        %v1036 = vunpack.c.l.b16 %v941
        %v1037 = vunpack.c.h.b16 %v941
        %v1038 = vunpack.c.l.b16 %v942
        %v1039 = vunpack.c.l.b16 %v943
        %v1040 = vunpack.c.h.b16 %v943
        %v1041 = vunpack.c.l.b16 %v944
        %v1042 = vpack.c.b16 %v997, %v994
        %v1043 = vpack.c.b16 %v998, %v995
        %v1044 = vpack.c.b16 %v999, %v996
        %v1045 = vpack.c.b16 %v1003, %v1000
        %v1046 = vpack.c.b16 %v1004, %v1001
        %v1047 = vpack.c.b16 %v1005, %v1002
        %v1048 = vpack.c.b16 %v1009, %v1006
        %v1049 = vpack.c.b16 %v1010, %v1007
        %v1050 = vpack.c.b16 %v1011, %v1008
        %v1051 = vpack.c.b16 %v1015, %v1012
        %v1052 = vpack.c.b16 %v1016, %v1013
        %v1053 = vpack.c.b16 %v1017, %v1014
        %v1054 = vpack.c.b16 %v1021, %v1018
        %v1055 = vpack.c.b16 %v1022, %v1019
        %v1056 = vpack.c.b16 %v1023, %v1020
        %v1057 = vpack.c.b16 %v1027, %v1024
        %v1058 = vpack.c.b16 %v1028, %v1025
        %v1059 = vpack.c.b16 %v1029, %v1026
        %v1060 = vpack.c.b16 %v1033, %v1030
        %v1061 = vpack.c.b16 %v1034, %v1031
        %v1062 = vpack.c.b16 %v1035, %v1032
        %v1063 = vpack.c.b16 %v1039, %v1036
        %v1064 = vpack.c.b16 %v1040, %v1037
        %v1065 = vpack.c.b16 %v1041, %v1038
        %1090 = vmatprep.subr.bf16.mxu0 %v1043
        %1091 = vmatpush1.bf16.msra.mxu0 %v1042
        %1092 = vmatprep.subr.bf16.mxu0 %v1046
        %1093 = vmatpush1.bf16.msra.mxu0 %v1045
        %1094 = vmatprep.subr.bf16.mxu0 %v1049
        %1095 = vmatpush1.bf16.msra.mxu0 %v1048
        %1096 = vmatprep.subr.bf16.mxu0 %v1052
        %1097 = vmatpush1.bf16.msra.mxu0 %v1051
        %1098 = vmatprep.subr.bf16.mxu0 %v1055
        %1099 = vmatpush1.bf16.msra.mxu0 %v1054
        %1100 = vmatprep.subr.bf16.mxu0 %v1058
        %1101 = vmatpush1.bf16.msra.mxu0 %v1057
        %1102 = vmatprep.subr.bf16.mxu0 %v1061
        %1103 = vmatpush1.bf16.msra.mxu0 %v1060
        %1104 = vmatprep.subr.bf16.mxu0 %v1064
        %1105 = vmatpush1.bf16.msra.mxu0 %v1063
        %1106 = vmatprep.subr.bf16.mxu0 0
        %1107 = vmatpush1.bf16.msra.mxu0 0
        %1108 = vmatprep.subr.bf16.mxu0 0
        %1109 = vmatpush1.bf16.msra.mxu0 0
        %1110 = vmatprep.subr.bf16.mxu0 0
        %1111 = vmatpush1.bf16.msra.mxu0 0
        %1112 = vmatprep.subr.bf16.mxu0 0
        %1113 = vmatpush1.bf16.msra.mxu0 0
        %1114 = vmatprep.subr.bf16.mxu0 0
        %1115 = vmatpush1.bf16.msra.mxu0 0
        %1116 = vmatprep.subr.bf16.mxu0 0
        %1117 = vmatpush1.bf16.msra.mxu0 0
        %1118 = vmatprep.subr.bf16.mxu0 0
        %1119 = vmatpush1.bf16.msra.mxu0 0
        %1120 = vmatprep.subr.bf16.mxu0 0
        %1121 = vmatpush1.bf16.msra.mxu0 0
        %1122 = vmatprep.mubr.bf16.mxu0 0
        %1123 = vmatmul.mubr.bf16.gmra.mrb[0].mxu0 %v912
        %v1124 = vpop.f32.mrb[0].mxu0
        %v1125 = vadd.f32 %v950, %v1124
        %v1126 = vpop.f32.mrb[0].mxu0
        %v1127 = vadd.f32 %v954, %v1126
        %v1128 = vpop.f32.mrb[0].mxu0
        %v1129 = vadd.f32 %v950, %v1128
        %v1130 = vpop.f32.mrb[0].mxu0
        %v1131 = vadd.f32 %v954, %v1130
        %1132 = vdwg.mxu0
        %1133 = vmatprep.subr.bf16.mxu0 0
        %1134 = vmatpush1.bf16.msra.mxu0 %v1044
        %1135 = vmatprep.subr.bf16.mxu0 0
        %1136 = vmatpush1.bf16.msra.mxu0 %v1047
        %1137 = vmatprep.subr.bf16.mxu0 0
        %1138 = vmatpush1.bf16.msra.mxu0 %v1050
        %1139 = vmatprep.subr.bf16.mxu0 0
        %1140 = vmatpush1.bf16.msra.mxu0 %v1053
        %1141 = vmatprep.subr.bf16.mxu0 0
        %1142 = vmatpush1.bf16.msra.mxu0 %v1056
        %1143 = vmatprep.subr.bf16.mxu0 0
        %1144 = vmatpush1.bf16.msra.mxu0 %v1059
        %1145 = vmatprep.subr.bf16.mxu0 0
        %1146 = vmatpush1.bf16.msra.mxu0 %v1062
        %1147 = vmatprep.subr.bf16.mxu0 0
        %1148 = vmatpush1.bf16.msra.mxu0 %v1065
        %1149 = vmatprep.subr.bf16.mxu0 0
        %1150 = vmatpush1.bf16.msra.mxu0 0
        %1151 = vmatprep.subr.bf16.mxu0 0
        %1152 = vmatpush1.bf16.msra.mxu0 0
        %1153 = vmatprep.subr.bf16.mxu0 0
        %1154 = vmatpush1.bf16.msra.mxu0 0
        %1155 = vmatprep.subr.bf16.mxu0 0
        %1156 = vmatpush1.bf16.msra.mxu0 0
        %1157 = vmatprep.subr.bf16.mxu0 0
        %1158 = vmatpush1.bf16.msra.mxu0 0
        %1159 = vmatprep.subr.bf16.mxu0 0
        %1160 = vmatpush1.bf16.msra.mxu0 0
        %1161 = vmatprep.subr.bf16.mxu0 0
        %1162 = vmatpush1.bf16.msra.mxu0 0
        %1163 = vmatprep.subr.bf16.mxu0 0
        %1164 = vmatpush1.bf16.msra.mxu0 0
        %1165 = vmatprep.mubr.bf16.mxu0 0
        %1166 = vmatmul.mubr.bf16.gmra.mrb[0].mxu0 %v912
        %v1167 = vpop.f32.mrb[0].mxu0
        %v1168 = vadd.f32 %v958, %v1167
        %v1169 = vpop.f32.mrb[0].mxu0
        %v1170 = vpop.f32.mrb[0].mxu0
        %v1171 = vadd.f32 %v958, %v1170
        %v1172 = vpop.f32.mrb[0].mxu0
        %1173 = vdwg.mxu0
        %v1174 = vld [vmem:[#allocation7] sm:$0x1]
        %v1175 = vpack.c.bf16 %v1125, %v1125
        %v1176 = vpack.c.bf16 %v1127, %v1127
        %v1178 = vlaneseq
        %v1179 = vshrl.u32 %v1178, 7
        %v1180 = vsub.s32 0, %v1179
        %v1181 = vrot.slane %v1174, %v1180
        %vm1183 = vcmask 523264
        %v1185 = vsel %vm1183, %v1175, 0
        %v1188 = vsel %vm1183, %v1176, 0
        %1190 = vmatprep.subr.bf16.mxu0 0
        %1191 = vmatpush1.bf16.xpose.msra.mxu0 %v1188
        %1192 = vmatprep.subr.bf16.mxu0 0
        %1193 = vmatpush1.bf16.xpose.msra.mxu0 0
        %1194 = vmatprep.subr.bf16.mxu0 0
        %1195 = vmatpush1.bf16.xpose.msra.mxu0 0
        %1196 = vmatprep.subr.bf16.mxu0 0
        %1197 = vmatpush1.bf16.xpose.msra.mxu0 0
        %1198 = vmatprep.subr.bf16.mxu0 0
        %1199 = vmatpush1.bf16.xpose.msra.mxu0 0
        %1200 = vmatprep.subr.bf16.mxu0 0
        %1201 = vmatpush1.bf16.xpose.msra.mxu0 0
        %1202 = vmatprep.subr.bf16.mxu0 0
        %1203 = vmatpush1.bf16.xpose.msra.mxu0 0
        %1204 = vmatprep.subr.bf16.mxu0 0
        %1205 = vmatpush1.bf16.xpose.msra.mxu0 0
        %1206 = vmatprep.subr.bf16.mxu0 0
        %1207 = vmatpush1.bf16.xpose.msra.mxu0 0
        %1208 = vmatprep.subr.bf16.mxu0 0
        %1209 = vmatpush1.bf16.xpose.msra.mxu0 0
        %1210 = vmatprep.subr.bf16.mxu0 0
        %1211 = vmatpush1.bf16.xpose.msra.mxu0 0
        %1212 = vmatprep.subr.bf16.mxu0 0
        %1213 = vmatpush1.bf16.xpose.msra.mxu0 0
        %1214 = vmatprep.subr.bf16.mxu0 0
        %1215 = vmatpush1.bf16.xpose.msra.mxu0 0
        %1216 = vmatprep.subr.bf16.mxu0 0
        %1217 = vmatpush1.bf16.xpose.msra.mxu0 0
        %1218 = vmatprep.subr.bf16.mxu0 0
        %1219 = vmatpush1.bf16.xpose.msra.mxu0 0
        %1220 = vmatprep.subr.bf16.mxu0 0
        %1221 = vmatpush1.bf16.xpose.msra.mxu0 0
        %1222 = vmatprep.mubr.bf16.mxu0 0
        %1223 = vmatmul.mubr.bf16.gmra.mrb[0].mxu0 %v1185
        %v1224 = vpop.f32.mrb[0].mxu0
        %v1225 = vadd.f32 %v1181, %v1224
        %v1226 = vpop.f32.mrb[0].mxu0
        %v1227 = vpop.f32.mrb[0].mxu0
        %v1228 = vpop.f32.mrb[0].mxu0
        %1229 = vdwg.mxu0
        %vm1230 = vcmask 64512
        %v1231 = vsel %vm1230, %v1225, -inf
        %1232 = vmax.xlane.f32.xlu0 %v1231
        %v1233 = vpop.xlane.xlu0 %1232
        %v1234 = vsub.f32 %v1225, %v1233
        %v1235 = vmul.f32 %v1234, 1.442695
        %v1236 = vpow.pop %v1235
        %v1237 = vsel %vm1230, %v1236, 0.0
        %1238 = vadd.xlane.f32.xlu0 %v1237
        %v1239 = vpop.xlane.xlu0 %1238
        %v1240 = vrcp.pop %v1239
        %v1241 = vmul.f32 %v1236, %v1240
        %v1242 = vpack.c.bf16 %v1241, %v1241
        %v1243 = vpack.c.bf16 %v1168, %v1168
        %v1245 = vsel %vm1230, %v1242, 0
        %vm1247 = vcmask 1043456
        %v1249 = vsel %vm1247, %v1243, 0
        %1251 = vmatprep.subr.bf16.mxu0 0
        %1252 = vmatpush1.bf16.msra.mxu0 %v1249
        %1253 = vmatprep.subr.bf16.mxu0 0
        %1254 = vmatpush1.bf16.msra.mxu0 0
        %1255 = vmatprep.subr.bf16.mxu0 0
        %1256 = vmatpush1.bf16.msra.mxu0 0
        %1257 = vmatprep.subr.bf16.mxu0 0
        %1258 = vmatpush1.bf16.msra.mxu0 0
        %1259 = vmatprep.subr.bf16.mxu0 0
        %1260 = vmatpush1.bf16.msra.mxu0 0
        %1261 = vmatprep.subr.bf16.mxu0 0
        %1262 = vmatpush1.bf16.msra.mxu0 0
        %1263 = vmatprep.subr.bf16.mxu0 0
        %1264 = vmatpush1.bf16.msra.mxu0 0
        %1265 = vmatprep.subr.bf16.mxu0 0
        %1266 = vmatpush1.bf16.msra.mxu0 0
        %1267 = vmatprep.subr.bf16.mxu0 0
        %1268 = vmatpush1.bf16.msra.mxu0 0
        %1269 = vmatprep.subr.bf16.mxu0 0
        %1270 = vmatpush1.bf16.msra.mxu0 0
        %1271 = vmatprep.subr.bf16.mxu0 0
        %1272 = vmatpush1.bf16.msra.mxu0 0
        %1273 = vmatprep.subr.bf16.mxu0 0
        %1274 = vmatpush1.bf16.msra.mxu0 0
        %1275 = vmatprep.subr.bf16.mxu0 0
        %1276 = vmatpush1.bf16.msra.mxu0 0
        %1277 = vmatprep.subr.bf16.mxu0 0
        %1278 = vmatpush1.bf16.msra.mxu0 0
        %1279 = vmatprep.subr.bf16.mxu0 0
        %1280 = vmatpush1.bf16.msra.mxu0 0
        %1281 = vmatprep.subr.bf16.mxu0 0
        %1282 = vmatpush1.bf16.msra.mxu0 0
        %1283 = vmatprep.mubr.bf16.mxu0 0
        %1284 = vmatmul.mubr.bf16.gmra.mrb[0].mxu0 %v1245
        %v1285 = vpop.f32.mrb[0].mxu0
        %v1286 = vadd.f32 0.0, %v1285
        %v1287 = vpop.f32.mrb[0].mxu0
        %v1288 = vpop.f32.mrb[0].mxu0
        %v1289 = vpop.f32.mrb[0].mxu0
        %1290 = vdwg.mxu0
        %1291 = vst.msk [vmem:[#allocation3] sm:$0xff] %vm1183, %v1286
        %1293 = vrot.lane.b32.xlu0 %v1175, 64
        %v1294 = vpop.permute.xlu0 %1293
        %1296 = vrot.lane.b32.xlu0 %v1176, 64
        %v1297 = vpop.permute.xlu0 %1296
        %v1299 = vsel %vm1183, %v1294, 0
        %v1302 = vsel %vm1183, %v1297, 0
        %1304 = vmatprep.subr.bf16.mxu0 0
        %1305 = vmatpush1.bf16.xpose.msra.mxu0 %v1302
        %1306 = vmatprep.subr.bf16.mxu0 0
        %1307 = vmatpush1.bf16.xpose.msra.mxu0 0
        %1308 = vmatprep.subr.bf16.mxu0 0
        %1309 = vmatpush1.bf16.xpose.msra.mxu0 0
        %1310 = vmatprep.subr.bf16.mxu0 0
        %1311 = vmatpush1.bf16.xpose.msra.mxu0 0
        %1312 = vmatprep.subr.bf16.mxu0 0
        %1313 = vmatpush1.bf16.xpose.msra.mxu0 0
        %1314 = vmatprep.subr.bf16.mxu0 0
        %1315 = vmatpush1.bf16.xpose.msra.mxu0 0
        %1316 = vmatprep.subr.bf16.mxu0 0
        %1317 = vmatpush1.bf16.xpose.msra.mxu0 0
        %1318 = vmatprep.subr.bf16.mxu0 0
        %1319 = vmatpush1.bf16.xpose.msra.mxu0 0
        %1320 = vmatprep.subr.bf16.mxu0 0
        %1321 = vmatpush1.bf16.xpose.msra.mxu0 0
        %1322 = vmatprep.subr.bf16.mxu0 0
        %1323 = vmatpush1.bf16.xpose.msra.mxu0 0
        %1324 = vmatprep.subr.bf16.mxu0 0
        %1325 = vmatpush1.bf16.xpose.msra.mxu0 0
        %1326 = vmatprep.subr.bf16.mxu0 0
        %1327 = vmatpush1.bf16.xpose.msra.mxu0 0
        %1328 = vmatprep.subr.bf16.mxu0 0
        %1329 = vmatpush1.bf16.xpose.msra.mxu0 0
        %1330 = vmatprep.subr.bf16.mxu0 0
        %1331 = vmatpush1.bf16.xpose.msra.mxu0 0
        %1332 = vmatprep.subr.bf16.mxu0 0
        %1333 = vmatpush1.bf16.xpose.msra.mxu0 0
        %1334 = vmatprep.subr.bf16.mxu0 0
        %1335 = vmatpush1.bf16.xpose.msra.mxu0 0
        %1336 = vmatprep.mubr.bf16.mxu0 0
        %1337 = vmatmul.mubr.bf16.gmra.mrb[0].mxu0 %v1299
        %v1338 = vpop.f32.mrb[0].mxu0
        %v1339 = vadd.f32 %v1181, %v1338
        %v1340 = vpop.f32.mrb[0].mxu0
        %v1341 = vpop.f32.mrb[0].mxu0
        %v1342 = vpop.f32.mrb[0].mxu0
        %1343 = vdwg.mxu0
        %v1344 = vsel %vm1230, %v1339, -inf
        %1345 = vmax.xlane.f32.xlu0 %v1344
        %v1346 = vpop.xlane.xlu0 %1345
        %v1347 = vsub.f32 %v1339, %v1346
        %v1348 = vmul.f32 %v1347, 1.442695
        %v1349 = vpow.pop %v1348
        %v1350 = vsel %vm1230, %v1349, 0.0
        %1351 = vadd.xlane.f32.xlu0 %v1350
        %v1352 = vpop.xlane.xlu0 %1351
        %v1353 = vrcp.pop %v1352
        %v1354 = vmul.f32 %v1349, %v1353
        %v1355 = vpack.c.bf16 %v1354, %v1354
        %1357 = vrot.lane.b32.xlu0 %v1243, 64
        %v1358 = vpop.permute.xlu0 %1357
        %v1360 = vsel %vm1230, %v1355, 0
        %v1363 = vsel %vm1247, %v1358, 0
        %1365 = vmatprep.subr.bf16.mxu0 0
        %1366 = vmatpush1.bf16.msra.mxu0 %v1363
        %1367 = vmatprep.subr.bf16.mxu0 0
        %1368 = vmatpush1.bf16.msra.mxu0 0
        %1369 = vmatprep.subr.bf16.mxu0 0
        %1370 = vmatpush1.bf16.msra.mxu0 0
        %1371 = vmatprep.subr.bf16.mxu0 0
        %1372 = vmatpush1.bf16.msra.mxu0 0
        %1373 = vmatprep.subr.bf16.mxu0 0
        %1374 = vmatpush1.bf16.msra.mxu0 0
        %1375 = vmatprep.subr.bf16.mxu0 0
        %1376 = vmatpush1.bf16.msra.mxu0 0
        %1377 = vmatprep.subr.bf16.mxu0 0
        %1378 = vmatpush1.bf16.msra.mxu0 0
        %1379 = vmatprep.subr.bf16.mxu0 0
        %1380 = vmatpush1.bf16.msra.mxu0 0
        %1381 = vmatprep.subr.bf16.mxu0 0
        %1382 = vmatpush1.bf16.msra.mxu0 0
        %1383 = vmatprep.subr.bf16.mxu0 0
        %1384 = vmatpush1.bf16.msra.mxu0 0
        %1385 = vmatprep.subr.bf16.mxu0 0
        %1386 = vmatpush1.bf16.msra.mxu0 0
        %1387 = vmatprep.subr.bf16.mxu0 0
        %1388 = vmatpush1.bf16.msra.mxu0 0
        %1389 = vmatprep.subr.bf16.mxu0 0
        %1390 = vmatpush1.bf16.msra.mxu0 0
        %1391 = vmatprep.subr.bf16.mxu0 0
        %1392 = vmatpush1.bf16.msra.mxu0 0
        %1393 = vmatprep.subr.bf16.mxu0 0
        %1394 = vmatpush1.bf16.msra.mxu0 0
        %1395 = vmatprep.subr.bf16.mxu0 0
        %1396 = vmatpush1.bf16.msra.mxu0 0
        %1397 = vmatprep.mubr.bf16.mxu0 0
        %1398 = vmatmul.mubr.bf16.gmra.mrb[0].mxu0 %v1360
        %v1399 = vpop.f32.mrb[0].mxu0
        %v1400 = vadd.f32 0.0, %v1399
        %v1401 = vpop.f32.mrb[0].mxu0
        %v1402 = vpop.f32.mrb[0].mxu0
        %v1403 = vpop.f32.mrb[0].mxu0
        %1404 = vdwg.mxu0
        %1406 = vrot.lane.b32.xlu0 %v1400, 64
        %v1407 = vpop.permute.xlu0 %1406
        %vm1409 = vcmask 1048064
        %1410 = vst.msk [vmem:[#allocation3] sm:$0xff] %vm1409, %v1407
        %s1411 = scalar_lea.vmem [#allocation7], 1
        %v1412 = vld [vmem:[%s1411] sm:$0x1]
        %v1413 = vpack.c.bf16 %v1129, %v1129
        %v1414 = vpack.c.bf16 %v1131, %v1131
        %v1416 = vlaneseq
        %v1417 = vshrl.u32 %v1416, 7
        %v1418 = vsub.s32 0, %v1417
        %v1419 = vrot.slane %v1412, %v1418
        %v1422 = vsel %vm1183, %v1413, 0
        %v1425 = vsel %vm1183, %v1414, 0
        %1427 = vmatprep.subr.bf16.mxu0 0
        %1428 = vmatpush1.bf16.xpose.msra.mxu0 %v1425
        %1429 = vmatprep.subr.bf16.mxu0 0
        %1430 = vmatpush1.bf16.xpose.msra.mxu0 0
        %1431 = vmatprep.subr.bf16.mxu0 0
        %1432 = vmatpush1.bf16.xpose.msra.mxu0 0
        %1433 = vmatprep.subr.bf16.mxu0 0
        %1434 = vmatpush1.bf16.xpose.msra.mxu0 0
        %1435 = vmatprep.subr.bf16.mxu0 0
        %1436 = vmatpush1.bf16.xpose.msra.mxu0 0
        %1437 = vmatprep.subr.bf16.mxu0 0
        %1438 = vmatpush1.bf16.xpose.msra.mxu0 0
        %1439 = vmatprep.subr.bf16.mxu0 0
        %1440 = vmatpush1.bf16.xpose.msra.mxu0 0
        %1441 = vmatprep.subr.bf16.mxu0 0
        %1442 = vmatpush1.bf16.xpose.msra.mxu0 0
        %1443 = vmatprep.subr.bf16.mxu0 0
        %1444 = vmatpush1.bf16.xpose.msra.mxu0 0
        %1445 = vmatprep.subr.bf16.mxu0 0
        %1446 = vmatpush1.bf16.xpose.msra.mxu0 0
        %1447 = vmatprep.subr.bf16.mxu0 0
        %1448 = vmatpush1.bf16.xpose.msra.mxu0 0
        %1449 = vmatprep.subr.bf16.mxu0 0
        %1450 = vmatpush1.bf16.xpose.msra.mxu0 0
        %1451 = vmatprep.subr.bf16.mxu0 0
        %1452 = vmatpush1.bf16.xpose.msra.mxu0 0
        %1453 = vmatprep.subr.bf16.mxu0 0
        %1454 = vmatpush1.bf16.xpose.msra.mxu0 0
        %1455 = vmatprep.subr.bf16.mxu0 0
        %1456 = vmatpush1.bf16.xpose.msra.mxu0 0
        %1457 = vmatprep.subr.bf16.mxu0 0
        %1458 = vmatpush1.bf16.xpose.msra.mxu0 0
        %1459 = vmatprep.mubr.bf16.mxu0 0
        %1460 = vmatmul.mubr.bf16.gmra.mrb[0].mxu0 %v1422
        %v1461 = vpop.f32.mrb[0].mxu0
        %v1462 = vadd.f32 %v1419, %v1461
        %v1463 = vpop.f32.mrb[0].mxu0
        %v1464 = vpop.f32.mrb[0].mxu0
        %v1465 = vpop.f32.mrb[0].mxu0
        %1466 = vdwg.mxu0
        %v1467 = vsel %vm1230, %v1462, -inf
        %1468 = vmax.xlane.f32.xlu0 %v1467
        %v1469 = vpop.xlane.xlu0 %1468
        %v1470 = vsub.f32 %v1462, %v1469
        %v1471 = vmul.f32 %v1470, 1.442695
        %v1472 = vpow.pop %v1471
        %v1473 = vsel %vm1230, %v1472, 0.0
        %1474 = vadd.xlane.f32.xlu0 %v1473
        %v1475 = vpop.xlane.xlu0 %1474
        %v1476 = vrcp.pop %v1475
        %v1477 = vmul.f32 %v1472, %v1476
        %v1478 = vpack.c.bf16 %v1477, %v1477
        %v1479 = vpack.c.bf16 %v1171, %v1171
        %v1481 = vsel %vm1230, %v1478, 0
        %v1484 = vsel %vm1247, %v1479, 0
        %1486 = vmatprep.subr.bf16.mxu0 0
        %1487 = vmatpush1.bf16.msra.mxu0 %v1484
        %1488 = vmatprep.subr.bf16.mxu0 0
        %1489 = vmatpush1.bf16.msra.mxu0 0
        %1490 = vmatprep.subr.bf16.mxu0 0
        %1491 = vmatpush1.bf16.msra.mxu0 0
        %1492 = vmatprep.subr.bf16.mxu0 0
        %1493 = vmatpush1.bf16.msra.mxu0 0
        %1494 = vmatprep.subr.bf16.mxu0 0
        %1495 = vmatpush1.bf16.msra.mxu0 0
        %1496 = vmatprep.subr.bf16.mxu0 0
        %1497 = vmatpush1.bf16.msra.mxu0 0
        %1498 = vmatprep.subr.bf16.mxu0 0
        %1499 = vmatpush1.bf16.msra.mxu0 0
        %1500 = vmatprep.subr.bf16.mxu0 0
        %1501 = vmatpush1.bf16.msra.mxu0 0
        %1502 = vmatprep.subr.bf16.mxu0 0
        %1503 = vmatpush1.bf16.msra.mxu0 0
        %1504 = vmatprep.subr.bf16.mxu0 0
        %1505 = vmatpush1.bf16.msra.mxu0 0
        %1506 = vmatprep.subr.bf16.mxu0 0
        %1507 = vmatpush1.bf16.msra.mxu0 0
        %1508 = vmatprep.subr.bf16.mxu0 0
        %1509 = vmatpush1.bf16.msra.mxu0 0
        %1510 = vmatprep.subr.bf16.mxu0 0
        %1511 = vmatpush1.bf16.msra.mxu0 0
        %1512 = vmatprep.subr.bf16.mxu0 0
        %1513 = vmatpush1.bf16.msra.mxu0 0
        %1514 = vmatprep.subr.bf16.mxu0 0
        %1515 = vmatpush1.bf16.msra.mxu0 0
        %1516 = vmatprep.subr.bf16.mxu0 0
        %1517 = vmatpush1.bf16.msra.mxu0 0
        %1518 = vmatprep.mubr.bf16.mxu0 0
        %1519 = vmatmul.mubr.bf16.gmra.mrb[0].mxu0 %v1481
        %v1520 = vpop.f32.mrb[0].mxu0
        %v1521 = vadd.f32 0.0, %v1520
        %v1522 = vpop.f32.mrb[0].mxu0
        %v1523 = vpop.f32.mrb[0].mxu0
        %v1524 = vpop.f32.mrb[0].mxu0
        %1525 = vdwg.mxu0
        %1526 = vst.msk [vmem:[#allocation3 + $0x8] sm:$0xff] %vm1183, %v1521
        %1528 = vrot.lane.b32.xlu0 %v1413, 64
        %v1529 = vpop.permute.xlu0 %1528
        %1531 = vrot.lane.b32.xlu0 %v1414, 64
        %v1532 = vpop.permute.xlu0 %1531
        %v1534 = vsel %vm1183, %v1529, 0
        %v1537 = vsel %vm1183, %v1532, 0
        %1539 = vmatprep.subr.bf16.mxu0 0
        %1540 = vmatpush1.bf16.xpose.msra.mxu0 %v1537
        %1541 = vmatprep.subr.bf16.mxu0 0
        %1542 = vmatpush1.bf16.xpose.msra.mxu0 0
        %1543 = vmatprep.subr.bf16.mxu0 0
        %1544 = vmatpush1.bf16.xpose.msra.mxu0 0
        %1545 = vmatprep.subr.bf16.mxu0 0
        %1546 = vmatpush1.bf16.xpose.msra.mxu0 0
        %1547 = vmatprep.subr.bf16.mxu0 0
        %1548 = vmatpush1.bf16.xpose.msra.mxu0 0
        %1549 = vmatprep.subr.bf16.mxu0 0
        %1550 = vmatpush1.bf16.xpose.msra.mxu0 0
        %1551 = vmatprep.subr.bf16.mxu0 0
        %1552 = vmatpush1.bf16.xpose.msra.mxu0 0
        %1553 = vmatprep.subr.bf16.mxu0 0
        %1554 = vmatpush1.bf16.xpose.msra.mxu0 0
        %1555 = vmatprep.subr.bf16.mxu0 0
        %1556 = vmatpush1.bf16.xpose.msra.mxu0 0
        %1557 = vmatprep.subr.bf16.mxu0 0
        %1558 = vmatpush1.bf16.xpose.msra.mxu0 0
        %1559 = vmatprep.subr.bf16.mxu0 0
        %1560 = vmatpush1.bf16.xpose.msra.mxu0 0
        %1561 = vmatprep.subr.bf16.mxu0 0
        %1562 = vmatpush1.bf16.xpose.msra.mxu0 0
        %1563 = vmatprep.subr.bf16.mxu0 0
        %1564 = vmatpush1.bf16.xpose.msra.mxu0 0
        %1565 = vmatprep.subr.bf16.mxu0 0
        %1566 = vmatpush1.bf16.xpose.msra.mxu0 0
        %1567 = vmatprep.subr.bf16.mxu0 0
        %1568 = vmatpush1.bf16.xpose.msra.mxu0 0
        %1569 = vmatprep.subr.bf16.mxu0 0
        %1570 = vmatpush1.bf16.xpose.msra.mxu0 0
        %1571 = vmatprep.mubr.bf16.mxu0 0
        %1572 = vmatmul.mubr.bf16.gmra.mrb[0].mxu0 %v1534
        %v1573 = vpop.f32.mrb[0].mxu0
        %v1574 = vadd.f32 %v1419, %v1573
        %v1575 = vpop.f32.mrb[0].mxu0
        %v1576 = vpop.f32.mrb[0].mxu0
        %v1577 = vpop.f32.mrb[0].mxu0
        %1578 = vdwg.mxu0
        %v1579 = vsel %vm1230, %v1574, -inf
        %1580 = vmax.xlane.f32.xlu0 %v1579
        %v1581 = vpop.xlane.xlu0 %1580
        %v1582 = vsub.f32 %v1574, %v1581
        %v1583 = vmul.f32 %v1582, 1.442695
        %v1584 = vpow.pop %v1583
        %v1585 = vsel %vm1230, %v1584, 0.0
        %1586 = vadd.xlane.f32.xlu0 %v1585
        %v1587 = vpop.xlane.xlu0 %1586
        %v1588 = vrcp.pop %v1587
        %v1589 = vmul.f32 %v1584, %v1588
        %v1590 = vpack.c.bf16 %v1589, %v1589
        %1592 = vrot.lane.b32.xlu0 %v1479, 64
        %v1593 = vpop.permute.xlu0 %1592
        %v1595 = vsel %vm1230, %v1590, 0
        %v1598 = vsel %vm1247, %v1593, 0
        %1600 = vmatprep.subr.bf16.mxu0 0
        %1601 = vmatpush1.bf16.msra.mxu0 %v1598
        %1602 = vmatprep.subr.bf16.mxu0 0
        %1603 = vmatpush1.bf16.msra.mxu0 0
        %1604 = vmatprep.subr.bf16.mxu0 0
        %1605 = vmatpush1.bf16.msra.mxu0 0
        %1606 = vmatprep.subr.bf16.mxu0 0
        %1607 = vmatpush1.bf16.msra.mxu0 0
        %1608 = vmatprep.subr.bf16.mxu0 0
        %1609 = vmatpush1.bf16.msra.mxu0 0
        %1610 = vmatprep.subr.bf16.mxu0 0
        %1611 = vmatpush1.bf16.msra.mxu0 0
        %1612 = vmatprep.subr.bf16.mxu0 0
        %1613 = vmatpush1.bf16.msra.mxu0 0
        %1614 = vmatprep.subr.bf16.mxu0 0
        %1615 = vmatpush1.bf16.msra.mxu0 0
        %1616 = vmatprep.subr.bf16.mxu0 0
        %1617 = vmatpush1.bf16.msra.mxu0 0
        %1618 = vmatprep.subr.bf16.mxu0 0
        %1619 = vmatpush1.bf16.msra.mxu0 0
        %1620 = vmatprep.subr.bf16.mxu0 0
        %1621 = vmatpush1.bf16.msra.mxu0 0
        %1622 = vmatprep.subr.bf16.mxu0 0
        %1623 = vmatpush1.bf16.msra.mxu0 0
        %1624 = vmatprep.subr.bf16.mxu0 0
        %1625 = vmatpush1.bf16.msra.mxu0 0
        %1626 = vmatprep.subr.bf16.mxu0 0
        %1627 = vmatpush1.bf16.msra.mxu0 0
        %1628 = vmatprep.subr.bf16.mxu0 0
        %1629 = vmatpush1.bf16.msra.mxu0 0
        %1630 = vmatprep.subr.bf16.mxu0 0
        %1631 = vmatpush1.bf16.msra.mxu0 0
        %1632 = vmatprep.mubr.bf16.mxu0 0
        %1633 = vmatmul.mubr.bf16.gmra.mrb[0].mxu0 %v1595
        %v1634 = vpop.f32.mrb[0].mxu0
        %v1635 = vadd.f32 0.0, %v1634
        %v1636 = vpop.f32.mrb[0].mxu0
        %v1637 = vpop.f32.mrb[0].mxu0
        %v1638 = vpop.f32.mrb[0].mxu0
        %1639 = vdwg.mxu0
        %1641 = vrot.lane.b32.xlu0 %v1635, 64
        %v1642 = vpop.permute.xlu0 %1641
        %1644 = vst.msk [vmem:[#allocation3 + $0x8] sm:$0xff] %vm1409, %v1642
        %v1645 = vld [vmem:[#allocation3] sm:$0xff]
        %v1646 = vld [vmem:[#allocation3 + $0x8] sm:$0xff]
        %v1647 = vpack.c.bf16 %v1646, %v1645
        %v1648 = vld [vmem:[%s713] sm:$0xf]
        %v1649 = vld [vmem:[%s713 + $0x4] sm:$0xf]
        %v1650 = vld [vmem:[%s713 + $0x8] sm:$0xf]
        %v1651 = vld [vmem:[%s713 + $0xc] sm:$0xf]
        %v1652 = vld [vmem:[%s713 + $0x10] sm:$0xf]
        %v1653 = vld [vmem:[%s713 + $0x14] sm:$0xf]
        %v1654 = vld [vmem:[%s713 + $0x18] sm:$0xf]
        %v1655 = vld [vmem:[%s713 + $0x1c] sm:$0xf]
        %v1656 = vld [vmem:[%s713 + $0x20] sm:$0xf]
        %v1657 = vld [vmem:[%s713 + $0x24] sm:$0xf]
        %v1658 = vld [vmem:[%s713 + $0x28] sm:$0xf]
        %v1659 = vld [vmem:[%s713 + $0x2c] sm:$0xf]
        %v1660 = vld [vmem:[%s713 + $0x30] sm:$0xf]
        %v1661 = vld [vmem:[%s713 + $0x34] sm:$0xf]
        %v1662 = vld [vmem:[%s713 + $0x38] sm:$0xf]
        %v1663 = vld [vmem:[%s713 + $0x3c] sm:$0xf]
        %v1664 = vld [vmem:[%s824] sm:$0x1]
        %v1666 = vlaneseq
        %v1667 = vshrl.u32 %v1666, 7
        %v1668 = vsub.s32 0, %v1667
        %v1669 = vrot.slane %v1664, %v1668
        %v1687 = vunpack.c.l.b16 %v1648
        %v1688 = vunpack.c.l.b16 %v1649
        %v1689 = vunpack.c.l.b16 %v1650
        %v1690 = vunpack.c.l.b16 %v1651
        %v1691 = vunpack.c.l.b16 %v1652
        %v1692 = vunpack.c.l.b16 %v1653
        %v1693 = vunpack.c.l.b16 %v1654
        %v1694 = vunpack.c.l.b16 %v1655
        %v1695 = vunpack.c.l.b16 %v1656
        %v1696 = vunpack.c.l.b16 %v1657
        %v1697 = vunpack.c.l.b16 %v1658
        %v1698 = vunpack.c.l.b16 %v1659
        %v1699 = vunpack.c.l.b16 %v1660
        %v1700 = vunpack.c.l.b16 %v1661
        %v1701 = vunpack.c.l.b16 %v1662
        %v1702 = vunpack.c.l.b16 %v1663
        %v1703 = vpack.c.b16 %v1688, %v1687
        %v1704 = vpack.c.b16 %v1690, %v1689
        %v1705 = vpack.c.b16 %v1692, %v1691
        %v1706 = vpack.c.b16 %v1694, %v1693
        %v1707 = vpack.c.b16 %v1696, %v1695
        %v1708 = vpack.c.b16 %v1698, %v1697
        %v1709 = vpack.c.b16 %v1700, %v1699
        %v1710 = vpack.c.b16 %v1702, %v1701
        %1719 = vmatprep.subr.bf16.mxu0 0
        %1720 = vmatpush1.bf16.msra.mxu0 %v1703
        %1721 = vmatprep.subr.bf16.mxu0 0
        %1722 = vmatpush1.bf16.msra.mxu0 %v1704
        %1723 = vmatprep.subr.bf16.mxu0 0
        %1724 = vmatpush1.bf16.msra.mxu0 %v1705
        %1725 = vmatprep.subr.bf16.mxu0 0
        %1726 = vmatpush1.bf16.msra.mxu0 %v1706
        %1727 = vmatprep.subr.bf16.mxu0 0
        %1728 = vmatpush1.bf16.msra.mxu0 %v1707
        %1729 = vmatprep.subr.bf16.mxu0 0
        %1730 = vmatpush1.bf16.msra.mxu0 %v1708
        %1731 = vmatprep.subr.bf16.mxu0 0
        %1732 = vmatpush1.bf16.msra.mxu0 %v1709
        %1733 = vmatprep.subr.bf16.mxu0 0
        %1734 = vmatpush1.bf16.msra.mxu0 %v1710
        %1735 = vmatprep.subr.bf16.mxu0 0
        %1736 = vmatpush1.bf16.msra.mxu0 0
        %1737 = vmatprep.subr.bf16.mxu0 0
        %1738 = vmatpush1.bf16.msra.mxu0 0
        %1739 = vmatprep.subr.bf16.mxu0 0
        %1740 = vmatpush1.bf16.msra.mxu0 0
        %1741 = vmatprep.subr.bf16.mxu0 0
        %1742 = vmatpush1.bf16.msra.mxu0 0
        %1743 = vmatprep.subr.bf16.mxu0 0
        %1744 = vmatpush1.bf16.msra.mxu0 0
        %1745 = vmatprep.subr.bf16.mxu0 0
        %1746 = vmatpush1.bf16.msra.mxu0 0
        %1747 = vmatprep.subr.bf16.mxu0 0
        %1748 = vmatpush1.bf16.msra.mxu0 0
        %1749 = vmatprep.subr.bf16.mxu0 0
        %1750 = vmatpush1.bf16.msra.mxu0 0
        %1751 = vmatprep.mubr.bf16.mxu0 0
        %1752 = vmatmul.mubr.bf16.gmra.mrb[0].mxu0 %v1647
        %v1753 = vpop.f32.mrb[0].mxu0
        %v1754 = vadd.f32 %v1669, %v1753
        %v1755 = vpop.f32.mrb[0].mxu0
        %v1756 = vpop.f32.mrb[0].mxu0
        %v1757 = vadd.f32 %v1669, %v1756
        %v1758 = vpop.f32.mrb[0].mxu0
        %1759 = vdwg.mxu0
        %v1760 = vadd.f32 %v910, %v1754
        %v1761 = vadd.f32 %v911, %v1757
        %v1762 = vld [vmem:[%s827] sm:$0x1]
        %v1763 = vld [vmem:[%s830] sm:$0x1]
        %1764 = vadd.xlane.f32.xlu0 %v1760
        %v1765 = vpop.xlane.xlu0 %1764
        %1766 = vadd.xlane.f32.xlu0 %v1761
        %v1767 = vpop.xlane.xlu0 %1766
        %v1768 = vrcp.pop 128.0
        %v1769 = vmul.f32 %v1765, %v1768
        %v1770 = vmul.f32 %v1767, %v1768
        %v1771 = vsub.f32 %v1760, %v1769
        %v1772 = vsub.f32 %v1761, %v1770
        %v1773 = vmul.f32 %v1771, %v1771
        %v1774 = vmul.f32 %v1772, %v1772
        %1775 = vadd.xlane.f32.xlu0 %v1773
        %v1776 = vpop.xlane.xlu0 %1775
        %1777 = vadd.xlane.f32.xlu0 %v1774
        %v1778 = vpop.xlane.xlu0 %1777
        %v1779 = vmul.f32 %v1776, %v1768
        %v1780 = vmul.f32 %v1778, %v1768
        %v1781 = vadd.f32 %v1779, 1e-12
        %v1782 = vadd.f32 %v1780, 1e-12
        %v1783 = vrsqrt.pop %v1781
        %v1784 = vrsqrt.pop %v1782
        %v1785 = vmul.f32 %v1771, %v1783
        %v1786 = vmul.f32 %v1772, %v1784
        %v1788 = vlaneseq
        %v1789 = vshrl.u32 %v1788, 7
        %v1790 = vsub.s32 0, %v1789
        %v1791 = vrot.slane %v1762, %v1790
        %v1793 = vmul.f32 %v1785, %v1791
        %v1794 = vmul.f32 %v1786, %v1791
        %v1796 = vlaneseq
        %v1797 = vshrl.u32 %v1796, 7
        %v1798 = vsub.s32 0, %v1797
        %v1799 = vrot.slane %v1763, %v1798
        %v1801 = vadd.f32 %v1793, %v1799
        %v1802 = vadd.f32 %v1794, %v1799
        %v1803 = vpack.c.bf16 %v1802, %v1801
        %v1804 = vld [vmem:[%s722] sm:$0xff]
        %v1805 = vld [vmem:[%s722 + $0x8] sm:$0xff]
        %v1806 = vld [vmem:[%s722 + $0x10] sm:$0xff]
        %v1807 = vld [vmem:[%s722 + $0x18] sm:$0xff]
        %v1808 = vld [vmem:[%s722 + $0x20] sm:$0xff]
        %v1809 = vld [vmem:[%s722 + $0x28] sm:$0xff]
        %v1810 = vld [vmem:[%s722 + $0x30] sm:$0xff]
        %v1811 = vld [vmem:[%s722 + $0x38] sm:$0xff]
        %v1812 = vld [vmem:[%s722 + $0x40] sm:$0xff]
        %v1813 = vld [vmem:[%s722 + $0x48] sm:$0xff]
        %v1814 = vld [vmem:[%s722 + $0x50] sm:$0xff]
        %v1815 = vld [vmem:[%s722 + $0x58] sm:$0xff]
        %v1816 = vld [vmem:[%s722 + $0x60] sm:$0xff]
        %v1817 = vld [vmem:[%s722 + $0x68] sm:$0xff]
        %v1818 = vld [vmem:[%s722 + $0x70] sm:$0xff]
        %v1819 = vld [vmem:[%s722 + $0x78] sm:$0xff]
        %v1820 = vld [vmem:[%s834] sm:$0x3]
        %v1822 = vlaneseq
        %v1823 = vshrl.u32 %v1822, 7
        %v1824 = vsub.s32 0, %v1823
        %v1825 = vrot.slane %v1820, %v1824
        %v1826 = vlaneseq
        %v1827 = vshrl.u32 %v1826, 7
        %v1828 = vsub.s32 1, %v1827
        %v1829 = vrot.slane %v1820, %v1828
        %v1848 = vunpack.c.l.b16 %v1804
        %v1849 = vunpack.c.h.b16 %v1804
        %v1850 = vunpack.c.l.b16 %v1805
        %v1851 = vunpack.c.h.b16 %v1805
        %v1852 = vunpack.c.l.b16 %v1806
        %v1853 = vunpack.c.h.b16 %v1806
        %v1854 = vunpack.c.l.b16 %v1807
        %v1855 = vunpack.c.h.b16 %v1807
        %v1856 = vunpack.c.l.b16 %v1808
        %v1857 = vunpack.c.h.b16 %v1808
        %v1858 = vunpack.c.l.b16 %v1809
        %v1859 = vunpack.c.h.b16 %v1809
        %v1860 = vunpack.c.l.b16 %v1810
        %v1861 = vunpack.c.h.b16 %v1810
        %v1862 = vunpack.c.l.b16 %v1811
        %v1863 = vunpack.c.h.b16 %v1811
        %v1864 = vunpack.c.l.b16 %v1812
        %v1865 = vunpack.c.h.b16 %v1812
        %v1866 = vunpack.c.l.b16 %v1813
        %v1867 = vunpack.c.h.b16 %v1813
        %v1868 = vunpack.c.l.b16 %v1814
        %v1869 = vunpack.c.h.b16 %v1814
        %v1870 = vunpack.c.l.b16 %v1815
        %v1871 = vunpack.c.h.b16 %v1815
        %v1872 = vunpack.c.l.b16 %v1816
        %v1873 = vunpack.c.h.b16 %v1816
        %v1874 = vunpack.c.l.b16 %v1817
        %v1875 = vunpack.c.h.b16 %v1817
        %v1876 = vunpack.c.l.b16 %v1818
        %v1877 = vunpack.c.h.b16 %v1818
        %v1878 = vunpack.c.l.b16 %v1819
        %v1879 = vunpack.c.h.b16 %v1819
        %v1880 = vpack.c.b16 %v1850, %v1848
        %v1881 = vpack.c.b16 %v1851, %v1849
        %v1882 = vpack.c.b16 %v1854, %v1852
        %v1883 = vpack.c.b16 %v1855, %v1853
        %v1884 = vpack.c.b16 %v1858, %v1856
        %v1885 = vpack.c.b16 %v1859, %v1857
        %v1886 = vpack.c.b16 %v1862, %v1860
        %v1887 = vpack.c.b16 %v1863, %v1861
        %v1888 = vpack.c.b16 %v1866, %v1864
        %v1889 = vpack.c.b16 %v1867, %v1865
        %v1890 = vpack.c.b16 %v1870, %v1868
        %v1891 = vpack.c.b16 %v1871, %v1869
        %v1892 = vpack.c.b16 %v1874, %v1872
        %v1893 = vpack.c.b16 %v1875, %v1873
        %v1894 = vpack.c.b16 %v1878, %v1876
        %v1895 = vpack.c.b16 %v1879, %v1877
        %1912 = vmatprep.subr.bf16.mxu0 %v1881
        %1913 = vmatpush1.bf16.msra.mxu0 %v1880
        %1914 = vmatprep.subr.bf16.mxu0 %v1883
        %1915 = vmatpush1.bf16.msra.mxu0 %v1882
        %1916 = vmatprep.subr.bf16.mxu0 %v1885
        %1917 = vmatpush1.bf16.msra.mxu0 %v1884
        %1918 = vmatprep.subr.bf16.mxu0 %v1887
        %1919 = vmatpush1.bf16.msra.mxu0 %v1886
        %1920 = vmatprep.subr.bf16.mxu0 %v1889
        %1921 = vmatpush1.bf16.msra.mxu0 %v1888
        %1922 = vmatprep.subr.bf16.mxu0 %v1891
        %1923 = vmatpush1.bf16.msra.mxu0 %v1890
        %1924 = vmatprep.subr.bf16.mxu0 %v1893
        %1925 = vmatpush1.bf16.msra.mxu0 %v1892
        %1926 = vmatprep.subr.bf16.mxu0 %v1895
        %1927 = vmatpush1.bf16.msra.mxu0 %v1894
        %1928 = vmatprep.subr.bf16.mxu0 0
        %1929 = vmatpush1.bf16.msra.mxu0 0
        %1930 = vmatprep.subr.bf16.mxu0 0
        %1931 = vmatpush1.bf16.msra.mxu0 0
        %1932 = vmatprep.subr.bf16.mxu0 0
        %1933 = vmatpush1.bf16.msra.mxu0 0
        %1934 = vmatprep.subr.bf16.mxu0 0
        %1935 = vmatpush1.bf16.msra.mxu0 0
        %1936 = vmatprep.subr.bf16.mxu0 0
        %1937 = vmatpush1.bf16.msra.mxu0 0
        %1938 = vmatprep.subr.bf16.mxu0 0
        %1939 = vmatpush1.bf16.msra.mxu0 0
        %1940 = vmatprep.subr.bf16.mxu0 0
        %1941 = vmatpush1.bf16.msra.mxu0 0
        %1942 = vmatprep.subr.bf16.mxu0 0
        %1943 = vmatpush1.bf16.msra.mxu0 0
        %1944 = vmatprep.mubr.bf16.mxu0 0
        %1945 = vmatmul.mubr.bf16.gmra.mrb[0].mxu0 %v1803
        %v1946 = vpop.f32.mrb[0].mxu0
        %v1947 = vadd.f32 %v1825, %v1946
        %v1948 = vpop.f32.mrb[0].mxu0
        %v1949 = vadd.f32 %v1829, %v1948
        %v1950 = vpop.f32.mrb[0].mxu0
        %v1951 = vadd.f32 %v1825, %v1950
        %v1952 = vpop.f32.mrb[0].mxu0
        %v1953 = vadd.f32 %v1829, %v1952
        %1954 = vdwg.mxu0
        %v1955 = vmul.f32 %v1947, 0.5
        %v1956 = vmul.f32 %v1949, 0.5
        %v1957 = vmul.f32 %v1951, 0.5
        %v1958 = vmul.f32 %v1953, 0.5
        %v1959 = vmul.f32 %v1947, 0.044715
        %v1960 = vmul.f32 %v1949, 0.044715
        %v1961 = vmul.f32 %v1951, 0.044715
        %v1962 = vmul.f32 %v1953, 0.044715
        %v1963 = vmul.f32 %v1959, %v1947
        %v1964 = vmul.f32 %v1960, %v1949
        %v1965 = vmul.f32 %v1961, %v1951
        %v1966 = vmul.f32 %v1962, %v1953
        %v1967 = vmul.f32 %v1963, %v1947
        %v1968 = vmul.f32 %v1964, %v1949
        %v1969 = vmul.f32 %v1965, %v1951
        %v1970 = vmul.f32 %v1966, %v1953
        %v1971 = vadd.f32 %v1947, %v1967
        %v1972 = vadd.f32 %v1949, %v1968
        %v1973 = vadd.f32 %v1951, %v1969
        %v1974 = vadd.f32 %v1953, %v1970
        %v1975 = vmul.f32 %v1971, 0.7978846
        %v1976 = vmul.f32 %v1972, 0.7978846
        %v1977 = vmul.f32 %v1973, 0.7978846
        %v1978 = vmul.f32 %v1974, 0.7978846
        %v1979 = vtanh.pop %v1975
        %v1980 = vtanh.pop %v1976
        %v1981 = vtanh.pop %v1977
        %v1982 = vtanh.pop %v1978
        %v1983 = vadd.f32 %v1979, 1.0
        %v1984 = vadd.f32 %v1980, 1.0
        %v1985 = vadd.f32 %v1981, 1.0
        %v1986 = vadd.f32 %v1982, 1.0
        %v1987 = vmul.f32 %v1955, %v1983
        %v1988 = vmul.f32 %v1956, %v1984
        %v1989 = vmul.f32 %v1957, %v1985
        %v1990 = vmul.f32 %v1958, %v1986
        %v1991 = vpack.c.bf16 %v1989, %v1987
        %v1992 = vpack.c.bf16 %v1990, %v1988
        %v1993 = vld [vmem:[%s731] sm:$0xf]
        %v1994 = vld [vmem:[%s731 + $0x4] sm:$0xf]
        %v1995 = vld [vmem:[%s731 + $0x8] sm:$0xf]
        %v1996 = vld [vmem:[%s731 + $0xc] sm:$0xf]
        %v1997 = vld [vmem:[%s731 + $0x10] sm:$0xf]
        %v1998 = vld [vmem:[%s731 + $0x14] sm:$0xf]
        %v1999 = vld [vmem:[%s731 + $0x18] sm:$0xf]
        %v2000 = vld [vmem:[%s731 + $0x1c] sm:$0xf]
        %v2001 = vld [vmem:[%s731 + $0x20] sm:$0xf]
        %v2002 = vld [vmem:[%s731 + $0x24] sm:$0xf]
        %v2003 = vld [vmem:[%s731 + $0x28] sm:$0xf]
        %v2004 = vld [vmem:[%s731 + $0x2c] sm:$0xf]
        %v2005 = vld [vmem:[%s731 + $0x30] sm:$0xf]
        %v2006 = vld [vmem:[%s731 + $0x34] sm:$0xf]
        %v2007 = vld [vmem:[%s731 + $0x38] sm:$0xf]
        %v2008 = vld [vmem:[%s731 + $0x3c] sm:$0xf]
        %v2009 = vld [vmem:[%s731 + $0x40] sm:$0xf]
        %v2010 = vld [vmem:[%s731 + $0x44] sm:$0xf]
        %v2011 = vld [vmem:[%s731 + $0x48] sm:$0xf]
        %v2012 = vld [vmem:[%s731 + $0x4c] sm:$0xf]
        %v2013 = vld [vmem:[%s731 + $0x50] sm:$0xf]
        %v2014 = vld [vmem:[%s731 + $0x54] sm:$0xf]
        %v2015 = vld [vmem:[%s731 + $0x58] sm:$0xf]
        %v2016 = vld [vmem:[%s731 + $0x5c] sm:$0xf]
        %v2017 = vld [vmem:[%s731 + $0x60] sm:$0xf]
        %v2018 = vld [vmem:[%s731 + $0x64] sm:$0xf]
        %v2019 = vld [vmem:[%s731 + $0x68] sm:$0xf]
        %v2020 = vld [vmem:[%s731 + $0x6c] sm:$0xf]
        %v2021 = vld [vmem:[%s731 + $0x70] sm:$0xf]
        %v2022 = vld [vmem:[%s731 + $0x74] sm:$0xf]
        %v2023 = vld [vmem:[%s731 + $0x78] sm:$0xf]
        %v2024 = vld [vmem:[%s731 + $0x7c] sm:$0xf]
        %v2025 = vld [vmem:[%s837] sm:$0x1]
        %v2027 = vlaneseq
        %v2028 = vshrl.u32 %v2027, 7
        %v2029 = vsub.s32 0, %v2028
        %v2030 = vrot.slane %v2025, %v2029
        %v2064 = vunpack.c.l.b16 %v1993
        %v2065 = vunpack.c.l.b16 %v1994
        %v2066 = vunpack.c.l.b16 %v1995
        %v2067 = vunpack.c.l.b16 %v1996
        %v2068 = vunpack.c.l.b16 %v1997
        %v2069 = vunpack.c.l.b16 %v1998
        %v2070 = vunpack.c.l.b16 %v1999
        %v2071 = vunpack.c.l.b16 %v2000
        %v2072 = vunpack.c.l.b16 %v2001
        %v2073 = vunpack.c.l.b16 %v2002
        %v2074 = vunpack.c.l.b16 %v2003
        %v2075 = vunpack.c.l.b16 %v2004
        %v2076 = vunpack.c.l.b16 %v2005
        %v2077 = vunpack.c.l.b16 %v2006
        %v2078 = vunpack.c.l.b16 %v2007
        %v2079 = vunpack.c.l.b16 %v2008
        %v2080 = vunpack.c.l.b16 %v2009
        %v2081 = vunpack.c.l.b16 %v2010
        %v2082 = vunpack.c.l.b16 %v2011
        %v2083 = vunpack.c.l.b16 %v2012
        %v2084 = vunpack.c.l.b16 %v2013
        %v2085 = vunpack.c.l.b16 %v2014
        %v2086 = vunpack.c.l.b16 %v2015
        %v2087 = vunpack.c.l.b16 %v2016
        %v2088 = vunpack.c.l.b16 %v2017
        %v2089 = vunpack.c.l.b16 %v2018
        %v2090 = vunpack.c.l.b16 %v2019
        %v2091 = vunpack.c.l.b16 %v2020
        %v2092 = vunpack.c.l.b16 %v2021
        %v2093 = vunpack.c.l.b16 %v2022
        %v2094 = vunpack.c.l.b16 %v2023
        %v2095 = vunpack.c.l.b16 %v2024
        %v2096 = vpack.c.b16 %v2065, %v2064
        %v2097 = vpack.c.b16 %v2067, %v2066
        %v2098 = vpack.c.b16 %v2069, %v2068
        %v2099 = vpack.c.b16 %v2071, %v2070
        %v2100 = vpack.c.b16 %v2073, %v2072
        %v2101 = vpack.c.b16 %v2075, %v2074
        %v2102 = vpack.c.b16 %v2077, %v2076
        %v2103 = vpack.c.b16 %v2079, %v2078
        %v2104 = vpack.c.b16 %v2081, %v2080
        %v2105 = vpack.c.b16 %v2083, %v2082
        %v2106 = vpack.c.b16 %v2085, %v2084
        %v2107 = vpack.c.b16 %v2087, %v2086
        %v2108 = vpack.c.b16 %v2089, %v2088
        %v2109 = vpack.c.b16 %v2091, %v2090
        %v2110 = vpack.c.b16 %v2093, %v2092
        %v2111 = vpack.c.b16 %v2095, %v2094
        %2128 = vmatprep.subr.bf16.mxu0 0
        %2129 = vmatpush1.bf16.msra.mxu0 %v2096
        %2130 = vmatprep.subr.bf16.mxu0 0
        %2131 = vmatpush1.bf16.msra.mxu0 %v2097
        %2132 = vmatprep.subr.bf16.mxu0 0
        %2133 = vmatpush1.bf16.msra.mxu0 %v2098
        %2134 = vmatprep.subr.bf16.mxu0 0
        %2135 = vmatpush1.bf16.msra.mxu0 %v2099
        %2136 = vmatprep.subr.bf16.mxu0 0
        %2137 = vmatpush1.bf16.msra.mxu0 %v2100
        %2138 = vmatprep.subr.bf16.mxu0 0
        %2139 = vmatpush1.bf16.msra.mxu0 %v2101
        %2140 = vmatprep.subr.bf16.mxu0 0
        %2141 = vmatpush1.bf16.msra.mxu0 %v2102
        %2142 = vmatprep.subr.bf16.mxu0 0
        %2143 = vmatpush1.bf16.msra.mxu0 %v2103
        %2144 = vmatprep.subr.bf16.mxu0 0
        %2145 = vmatpush1.bf16.msra.mxu0 %v2104
        %2146 = vmatprep.subr.bf16.mxu0 0
        %2147 = vmatpush1.bf16.msra.mxu0 %v2105
        %2148 = vmatprep.subr.bf16.mxu0 0
        %2149 = vmatpush1.bf16.msra.mxu0 %v2106
        %2150 = vmatprep.subr.bf16.mxu0 0
        %2151 = vmatpush1.bf16.msra.mxu0 %v2107
        %2152 = vmatprep.subr.bf16.mxu0 0
        %2153 = vmatpush1.bf16.msra.mxu0 %v2108
        %2154 = vmatprep.subr.bf16.mxu0 0
        %2155 = vmatpush1.bf16.msra.mxu0 %v2109
        %2156 = vmatprep.subr.bf16.mxu0 0
        %2157 = vmatpush1.bf16.msra.mxu0 %v2110
        %2158 = vmatprep.subr.bf16.mxu0 0
        %2159 = vmatpush1.bf16.msra.mxu0 %v2111
        %2160 = vmatprep.mubr.bf16.mxu0 %v1992
        %2161 = vmatmul.mubr.bf16.gmra.mrb[0].mxu0 %v1991
        %v2162 = vpop.f32.mrb[0].mxu0
        %v2163 = vadd.f32 %v2030, %v2162
        %v2164 = vpop.f32.mrb[0].mxu0
        %v2165 = vpop.f32.mrb[0].mxu0
        %v2166 = vadd.f32 %v2030, %v2165
        %v2167 = vpop.f32.mrb[0].mxu0
        %2168 = vdwg.mxu0
        %v2169 = vadd.f32 %v1801, %v2163
        %v2170 = vadd.f32 %v1802, %v2166
        %v2171 = vld [vmem:[%s840] sm:$0x1]
        %v2172 = vld [vmem:[%s843] sm:$0x1]
        %2173 = vadd.xlane.f32.xlu0 %v2169
        %v2174 = vpop.xlane.xlu0 %2173
        %2175 = vadd.xlane.f32.xlu0 %v2170
        %v2176 = vpop.xlane.xlu0 %2175
        %v2177 = vmul.f32 %v2174, %v1768
        %v2178 = vmul.f32 %v2176, %v1768
        %v2179 = vsub.f32 %v2169, %v2177
        %v2180 = vsub.f32 %v2170, %v2178
        %v2181 = vmul.f32 %v2179, %v2179
        %v2182 = vmul.f32 %v2180, %v2180
        %2183 = vadd.xlane.f32.xlu0 %v2181
        %v2184 = vpop.xlane.xlu0 %2183
        %2185 = vadd.xlane.f32.xlu0 %v2182
        %v2186 = vpop.xlane.xlu0 %2185
        %v2187 = vmul.f32 %v2184, %v1768
        %v2188 = vmul.f32 %v2186, %v1768
        %v2189 = vadd.f32 %v2187, 1e-12
        %v2190 = vadd.f32 %v2188, 1e-12
        %v2191 = vrsqrt.pop %v2189
        %v2192 = vrsqrt.pop %v2190
        %v2193 = vmul.f32 %v2179, %v2191
        %v2194 = vmul.f32 %v2180, %v2192
        %v2196 = vlaneseq
        %v2197 = vshrl.u32 %v2196, 7
        %v2198 = vsub.s32 0, %v2197
        %v2199 = vrot.slane %v2171, %v2198
        %v2201 = vmul.f32 %v2193, %v2199
        %v2202 = vmul.f32 %v2194, %v2199
        %v2204 = vlaneseq
        %v2205 = vshrl.u32 %v2204, 7
        %v2206 = vsub.s32 0, %v2205
        %v2207 = vrot.slane %v2172, %v2206
        %v2209 = vadd.f32 %v2201, %v2207
        %v2210 = vadd.f32 %v2202, %v2207
        %2211 = vst [vmem:[#allocation2] sm:$0xff] %v2209
        %2212 = vst [vmem:[#allocation2 + $0x8] sm:$0xff] %v2210
        %p2213 = scmp.eq.s32.totalorder %s36, 1
        // Predicated region
        $region121: #{tpu_custom_call.1} parent=83 // pred_check
          %p2214 = pneg %p2213
        $region122: #{tpu_custom_call.1} parent=83 // pred_check_branch
          %2216 = sbr.rel (%p2214) target = $region124
        $region123: #{tpu_custom_call.1} parent=83 // pred_region
          %2217 = vst [vmem:[#allocation16] sm:$0x1] %v2209
          %s2218 = scalar_lea.vmem [#allocation16], 1
          %2219 = vst [vmem:[%s2218] sm:$0x1] %v2210
        $region124: #{tpu_custom_call.1} parent=83 // pred_fallthru
          _
        // Predicated region
        $region125: #{tpu_custom_call.1} parent=83 // pred_check
          %p2220 = pneg %p467
        $region126: #{tpu_custom_call.1} parent=83 // pred_check_branch
          %2222 = sbr.rel (%p2220) target = $region128
        $region127: #{tpu_custom_call.1} parent=83 // pred_region
          %s2223 = smul.u32 2, %s35
          %s2225 = ssub.s32 32, 32
          %2226 = vsyncadd [#allocation6], %s2225
          %s2227 = smul.addr %s2223, 16
          %s2228 = scalar_lea.hbm %s16, %s2227
          %s2229 = sshll.u32 [#allocation16], 4
          %s2230 = int_to_ptr.vmem [resolvable:$true] %s2229
          %2235 = dma.vmem_to_hbm [thread:$0]  %s2230, 32, %s2228, [#allocation6], 16, 16, 1
        $region128: #{tpu_custom_call.1} parent=83 // pred_fallthru
          _
        // Predicated region
        $region129: #{tpu_custom_call.1} parent=83 // pred_check
          %p2236 = pneg %p467
        $region130: #{tpu_custom_call.1} parent=83 // pred_check_branch
          %2238 = sbr.rel (%p2236) target = $region132
        $region131: #{tpu_custom_call.1} parent=83 // pred_region
          %2239 = dma.done [#allocation6], 32
        $region132: #{tpu_custom_call.1} parent=83 // pred_fallthru
          _
      $region84: #{tpu_custom_call.1} parent=5 // pred_fallthru
        _
      %p2240 = scmp.le.s32.totalorder 2, %s26
      // Predicated region
      $region133: #{tpu_custom_call.1} parent=5 // pred_check
        %p2241 = pneg %p2240
      $region134: #{tpu_custom_call.1} parent=5 // pred_check_branch
        %2243 = sbr.rel (%p2241) target = $region136
      $region135: #{tpu_custom_call.1} parent=5 // pred_region
        %s2244 = ssub.s32 %s26, 2
      $region136: #{tpu_custom_call.1} parent=5 // pred_fallthru
        _
    $region6: #{tpu_custom_call.1} parent=1 // loop_footer
      %s30 = sadd.s32 1, %s26
    $region7: #{tpu_custom_call.1} parent=1 // loop_footer_branch
      %25 = sbr.rel target = $region3
    $region8: #{tpu_custom_call.1} parent=1 // loop_exit
      _
    %2245 = vsyncpa [#allocation5], 1
    %s2246 = scalar_lea.sflag [#allocation5], 1
    %2247 = vsyncpa %s2246, 1
    %2248 = vsyncpa [#allocation8], 1
    %2249 = vsyncpa [#allocation11], 1
    %2250 = vsyncpa [#allocation6], 1
    %s2251 = scalar_lea.sflag [#allocation6], 1
    %2252 = vsyncpa %s2251, 1

</llo_original>
